<compile_context>
chip_gen: v7x
topology: tpu7x:2x2x1
jax: 0.10.0
libtpu: 0.0.40
codegen_flags: <defaults>
</compile_context>

<pallas_src>
import functools

import jax
import jax.numpy as jnp
import numpy as np
from jax.experimental import pallas as pl
from jax.experimental.pallas import tpu as pltpu


# ----------------------------------------------------------------------------
# Fused kernel: 2x (MLP encoder + reparameterization) + normalize + similarity
#               + vectorized contrastive sample loss.
# ----------------------------------------------------------------------------
def fused_kernel(si_ref, sj_ref, sjh_ref,                    # VMEM [S, 1] int32
                 mic_x_ref, dis_x_ref,                       # VMEM inputs
                 mw1, mb1, mw2, mb2, mw3, mb3, mw4m, mb4m, mw4v, mb4v,
                 dw1, db1, dw2, db2, dw3, db3, dw4m, db4m, dw4v, db4v,
                 eps_m_ref, eps_d_ref,
                 loss_ref,                                   # SMEM (1, 1) f32
                 mic_z_ref, dis_z_ref,                       # VMEM outputs
                 *, tau, n_samples):

    def encode(x, w1, b1, w2, b2, w3, b3, w4m, b4m, w4v, b4v, eps):
        h = jnp.maximum(
            jnp.dot(x, w1[...], preferred_element_type=jnp.float32) + b1[...], 0.0)
        h = jnp.maximum(
            jnp.dot(h, w2[...], preferred_element_type=jnp.float32) + b2[...], 0.0)
        h = jnp.maximum(
            jnp.dot(h, w3[...], preferred_element_type=jnp.float32) + b3[...], 0.0)
        # Last layer split into lane-aligned mu / log_var matmuls (no lane slice).
        mu = jnp.dot(h, w4m[...], preferred_element_type=jnp.float32) + b4m[...]
        log_var = jnp.dot(h, w4v[...], preferred_element_type=jnp.float32) + b4v[...]
        return mu + eps * jnp.exp(0.5 * log_var)

    z1 = encode(mic_x_ref[...], mw1, mb1, mw2, mb2, mw3, mb3,
                mw4m, mb4m, mw4v, mb4v, eps_m_ref[...])
    z2 = encode(dis_x_ref[...], dw1, db1, dw2, db2, dw3, db3,
                dw4m, db4m, dw4v, db4v, eps_d_ref[...])

    mic_z_ref[...] = z1
    dis_z_ref[...] = z2

    # F.normalize(z, p=2, dim=1): clamp the squared norm at 1e-24 so that
    # rsqrt(max(ss, 1e-24)) == 1 / max(||z||, 1e-12)  (same eps semantics).
    inv1 = jax.lax.rsqrt(jnp.maximum(jnp.sum(z1 * z1, axis=1, keepdims=True), 1e-24))
    inv2 = jax.lax.rsqrt(jnp.maximum(jnp.sum(z2 * z2, axis=1, keepdims=True), 1e-24))
    z1n = z1 * inv1
    z2n = z2 * inv2

    # loss_weight = z1n @ z2n.T, contracting the shared latent axis directly
    # (no explicit transpose / XLU shuffle).
    sim = jax.lax.dot_general(z1n, z2n,
                              dimension_numbers=(((1,), (1,)), ((), ())),
                              preferred_element_type=jnp.float32)   # [Nm, Nd]

    n_mic = z1.shape[0]
    n_dis = z2.shape[0]

    # ---- Vectorized contrastive loss over all S samples at once -------------
    # One-hot masks from the index columns (pure VPU compares, no scalar loads).
    mic_iota = jax.lax.broadcasted_iota(jnp.int32, (n_samples, n_mic), 1)
    dis_iota = jax.lax.broadcasted_iota(jnp.int32, (n_samples, n_dis), 1)
    oh_i = (mic_iota == si_ref[...]).astype(jnp.float32)            # [S, Nm]
    oh_j = (dis_iota == sj_ref[...]).astype(jnp.float32)            # [S, Nd]
    oh_jh = (dis_iota == sjh_ref[...]).astype(jnp.float32)          # [S, Nd]

    # Gather the S relevant rows of sim with one MXU matmul (exact: 0/1 operand).
    rows = jax.lax.dot_general(oh_i, sim,
                               dimension_numbers=(((1,), (0,)), ((), ())),
                               preferred_element_type=jnp.float32)  # [S, Nd]
    lw_ij = jnp.sum(rows * oh_j, axis=1, keepdims=True)             # [S, 1]
    lw_ijh = jnp.sum(rows * oh_jh, axis=1, keepdims=True)           # [S, 1]

    # NOTE: the original PyTorch code uses loss_weight[i, j_hat] for BOTH
    # "negative" terms (neg_sim_i_j_hat and neg_sim_i_hat_j) and never uses
    # column 2 (i_hat); we reproduce that behaviour exactly.
    inv_tau = 1.0 / tau
    pos = jnp.exp(lw_ij * inv_tau)                                  # [S, 1]
    neg = 2.0 * jnp.exp(lw_ijh * inv_tau)                           # [S, 1]
    l1 = -jnp.log(2.0 * pos / (2.0 * pos + neg))
    l2 = jnp.abs((lw_ij + 1.0) * 0.5 - 1.0) + (lw_ijh + 1.0)

    loss_ref[0, 0] = jnp.sum(l1 + l2) / float(n_samples)


# ----------------------------------------------------------------------------
# Forward wrapper (single pallas_call)
# ----------------------------------------------------------------------------
def micro_disease_forward(mic_feat, dis_feat, samples, mic_params, dis_params,
                          eps_mic, eps_dis, tau):
    n_mic, latent_dim = eps_mic.shape
    n_dis = eps_dis.shape[0]
    n_samples = samples.shape[0]

    def split_last(p):
        # Split the [64, 2L] final layer into lane-aligned mu / log_var halves
        # (done once, outside the kernel).
        return (p["w1"], p["b1"], p["w2"], p["b2"], p["w3"], p["b3"],
                p["w4"][:, :latent_dim], p["b4"][:, :latent_dim],
                p["w4"][:, latent_dim:], p["b4"][:, latent_dim:])

    mic_p = split_last(mic_params)
    dis_p = split_last(dis_params)

    # Index columns for the vectorized loss: (i, j, j_hat).  i_hat is unused by
    # the original PyTorch loss and is intentionally dropped.
    samp_i = samples[:, 0:1].astype(jnp.int32)    # [S, 1]
    samp_j = samples[:, 1:2].astype(jnp.int32)    # [S, 1]
    samp_jh = samples[:, 3:4].astype(jnp.int32)   # [S, 1]

    vmem = pl.BlockSpec(memory_space=pltpu.MemorySpace.VMEM)
    smem = pl.BlockSpec(memory_space=pltpu.MemorySpace.SMEM)

    args = (samp_i, samp_j, samp_jh, mic_feat, dis_feat,
            *mic_p, *dis_p, eps_mic, eps_dis)
    in_specs = [vmem] * len(args)

    loss, mic_z, dis_z = pl.pallas_call(
        functools.partial(fused_kernel, tau=float(tau), n_samples=int(n_samples)),
        out_shape=(jax.ShapeDtypeStruct((1, 1), jnp.float32),
                   jax.ShapeDtypeStruct((n_mic, latent_dim), jnp.float32),
                   jax.ShapeDtypeStruct((n_dis, latent_dim), jnp.float32)),
        in_specs=in_specs,
        out_specs=(smem, vmem, vmem),
    )(*args)
    return loss[0, 0], mic_z, dis_z


# ----------------------------------------------------------------------------
# Parameter setup (deterministic, synthetic)
# ----------------------------------------------------------------------------
def init_encoder_params(key, in_dim, latent_dim):
    dims = [in_dim, 512, 256, 64, latent_dim * 2]
    params = {}
    keys = jax.random.split(key, len(dims) - 1)
    for idx, (d_in, d_out) in enumerate(zip(dims[:-1], dims[1:]), start=1):
        scale = 1.0 / np.sqrt(d_in)
        params[f"w{idx}"] = (scale *
                             jax.random.normal(keys[idx - 1], (d_in, d_out))
                             ).astype(jnp.float32)
        params[f"b{idx}"] = jnp.zeros((1, d_out), jnp.float32)
    return params


# ----------------------------------------------------------------------------
# Pure-JAX reference (mirrors the PyTorch math) for a correctness check
# ----------------------------------------------------------------------------
def reference_forward(mic_feat, dis_feat, samples, mic_params, dis_params,
                      eps_mic, eps_dis, tau):
    def enc(x, p, eps):
        h = jnp.maximum(x @ p["w1"] + p["b1"], 0.0)
        h = jnp.maximum(h @ p["w2"] + p["b2"], 0.0)
        h = jnp.maximum(h @ p["w3"] + p["b3"], 0.0)
        out = h @ p["w4"] + p["b4"]
        ldim = eps.shape[1]
        mu, log_var = out[:, :ldim], out[:, ldim:]
        return mu + eps * jnp.exp(0.5 * log_var)

    z1 = enc(mic_feat, mic_params, eps_mic)
    z2 = enc(dis_feat, dis_params, eps_dis)
    z1n = z1 / jnp.maximum(jnp.linalg.norm(z1, axis=1, keepdims=True), 1e-12)
    z2n = z2 / jnp.maximum(jnp.linalg.norm(z2, axis=1, keepdims=True), 1e-12)
    lw = z1n @ z2n.T
    loss = 0.0
    for s in np.asarray(samples):
        i, j, _i_hat, j_hat = map(int, s)
        pos = jnp.exp(lw[i, j] / tau)
        neg = 2.0 * jnp.exp(lw[i, j_hat] / tau)
        l1 = -jnp.log(2.0 * pos / (2.0 * pos + neg))
        l2 = jnp.abs((lw[i, j] + 1.0) / 2.0 - 1.0) + (lw[i, j_hat] + 1.0)
        loss = loss + l1 + l2
    return loss / samples.shape[0], z1, z2


if __name__ == "__main__":
    # Small, module-consistent shapes.
    mic_input_dim = 48
    dis_input_dim = 40
    latent_dim = 16
    n_mic = 8
    n_dis = 6
    n_samples = 8
    tau = 1.0

    key = jax.random.PRNGKey(0)
    (k_mic_x, k_dis_x, k_mic_p, k_dis_p,
     k_eps_m, k_eps_d, k_si, k_sj, k_sih, k_sjh) = jax.random.split(key, 10)

    mic_feat = jax.random.normal(k_mic_x, (n_mic, mic_input_dim), jnp.float32)
    dis_feat = jax.random.normal(k_dis_x, (n_dis, dis_input_dim), jnp.float32)

    mic_params = init_encoder_params(k_mic_p, mic_input_dim, latent_dim)
    dis_params = init_encoder_params(k_dis_p, dis_input_dim, latent_dim)

    eps_mic = jax.random.normal(k_eps_m, (n_mic, latent_dim), jnp.float32)
    eps_dis = jax.random.normal(k_eps_d, (n_dis, latent_dim), jnp.float32)

    samples = jnp.stack([
        jax.random.randint(k_si, (n_samples,), 0, n_mic),
        jax.random.randint(k_sj, (n_samples,), 0, n_dis),
        jax.random.randint(k_sih, (n_samples,), 0, n_mic),
        jax.random.randint(k_sjh, (n_samples,), 0, n_dis),
    ], axis=1).astype(jnp.int32)                       # [S, 4] = (i, j, i_hat, j_hat)

    loss, mic_latent, dis_latent = micro_disease_forward(
        mic_feat, dis_feat, samples, mic_params, dis_params,
        eps_mic, eps_dis, tau)
    jax.block_until_ready((loss, mic_latent, dis_latent))

    ref_loss, ref_mic, ref_dis = reference_forward(
        mic_feat, dis_feat, samples, mic_params, dis_params,
        eps_mic, eps_dis, tau)

    np.testing.assert_allclose(np.asarray(mic_latent), np.asarray(ref_mic),
                               rtol=1e-4, atol=1e-4)
    np.testing.assert_allclose(np.asarray(dis_latent), np.asarray(ref_dis),
                               rtol=1e-4, atol=1e-4)
    np.testing.assert_allclose(float(loss), float(ref_loss),
                               rtol=1e-4, atol=1e-4)

    print("KERNEL_OK")
</pallas_src>

<mosaic_0001>
module attributes {stable_mosaic.version = 11 : i64} {
  func.func @fused_kernel(%arg0: memref<8x1xi32, #tpu.memory_space<vmem>>, %arg1: memref<8x1xi32, #tpu.memory_space<vmem>>, %arg2: memref<8x1xi32, #tpu.memory_space<vmem>>, %arg3: memref<8x48xf32, #tpu.memory_space<vmem>>, %arg4: memref<6x40xf32, #tpu.memory_space<vmem>>, %arg5: memref<48x512xf32, #tpu.memory_space<vmem>>, %arg6: memref<1x512xf32, #tpu.memory_space<vmem>>, %arg7: memref<512x256xf32, #tpu.memory_space<vmem>>, %arg8: memref<1x256xf32, #tpu.memory_space<vmem>>, %arg9: memref<256x64xf32, #tpu.memory_space<vmem>>, %arg10: memref<1x64xf32, #tpu.memory_space<vmem>>, %arg11: memref<64x16xf32, #tpu.memory_space<vmem>>, %arg12: memref<1x16xf32, #tpu.memory_space<vmem>>, %arg13: memref<64x16xf32, #tpu.memory_space<vmem>>, %arg14: memref<1x16xf32, #tpu.memory_space<vmem>>, %arg15: memref<40x512xf32, #tpu.memory_space<vmem>>, %arg16: memref<1x512xf32, #tpu.memory_space<vmem>>, %arg17: memref<512x256xf32, #tpu.memory_space<vmem>>, %arg18: memref<1x256xf32, #tpu.memory_space<vmem>>, %arg19: memref<256x64xf32, #tpu.memory_space<vmem>>, %arg20: memref<1x64xf32, #tpu.memory_space<vmem>>, %arg21: memref<64x16xf32, #tpu.memory_space<vmem>>, %arg22: memref<1x16xf32, #tpu.memory_space<vmem>>, %arg23: memref<64x16xf32, #tpu.memory_space<vmem>>, %arg24: memref<1x16xf32, #tpu.memory_space<vmem>>, %arg25: memref<8x16xf32, #tpu.memory_space<vmem>>, %arg26: memref<6x16xf32, #tpu.memory_space<vmem>>, %arg27: memref<1x1xf32, #tpu.memory_space<smem>>, %arg28: memref<8x16xf32, #tpu.memory_space<vmem>>, %arg29: memref<6x16xf32, #tpu.memory_space<vmem>>) attributes {dimension_semantics = [], scalar_prefetch = 0 : i64, scratch_operands = 0 : i64, tpu.core_type = #tpu.core_type<tc>} {
    %c0 = arith.constant 0 : index
    %c0_0 = arith.constant 0 : index
    %0 = vector.load %arg3[%c0, %c0_0] : memref<8x48xf32, #tpu.memory_space<vmem>>, vector<8x48xf32>
    %c0_1 = arith.constant 0 : index
    %c0_2 = arith.constant 0 : index
    %1 = vector.load %arg25[%c0_1, %c0_2] : memref<8x16xf32, #tpu.memory_space<vmem>>, vector<8x16xf32>
    %c0_3 = arith.constant 0 : index
    %c0_4 = arith.constant 0 : index
    %2 = vector.load %arg5[%c0_3, %c0_4] : memref<48x512xf32, #tpu.memory_space<vmem>>, vector<48x512xf32>
    %cst = arith.constant dense<0.000000e+00> : vector<8x512xf32>
    %3 = tpu.matmul %0, %2, %cst {dimension_numbers = #tpu.dot_dimension_numbers<[1], [0], [0], [1], [0, 0, 1, 1], [], []>} : vector<8x48xf32>, vector<48x512xf32>, vector<8x512xf32> -> vector<8x512xf32>
    %c0_5 = arith.constant 0 : index
    %c0_6 = arith.constant 0 : index
    %4 = vector.load %arg6[%c0_5, %c0_6] : memref<1x512xf32, #tpu.memory_space<vmem>>, vector<1x512xf32>
    %5 = vector.broadcast %4 : vector<1x512xf32> to vector<8x512xf32>
    %6 = arith.addf %3, %5 : vector<8x512xf32>
    %cst_7 = arith.constant 0.000000e+00 : f32
    %7 = vector.broadcast %cst_7 : f32 to vector<8x512xf32>
    %8 = arith.maximumf %6, %7 : vector<8x512xf32>
    %c0_8 = arith.constant 0 : index
    %c0_9 = arith.constant 0 : index
    %9 = vector.load %arg7[%c0_8, %c0_9] : memref<512x256xf32, #tpu.memory_space<vmem>>, vector<512x256xf32>
    %cst_10 = arith.constant dense<0.000000e+00> : vector<8x256xf32>
    %10 = tpu.matmul %8, %9, %cst_10 {dimension_numbers = #tpu.dot_dimension_numbers<[1], [0], [0], [1], [0, 0, 1, 1], [], []>} : vector<8x512xf32>, vector<512x256xf32>, vector<8x256xf32> -> vector<8x256xf32>
    %c0_11 = arith.constant 0 : index
    %c0_12 = arith.constant 0 : index
    %11 = vector.load %arg8[%c0_11, %c0_12] : memref<1x256xf32, #tpu.memory_space<vmem>>, vector<1x256xf32>
    %12 = vector.broadcast %11 : vector<1x256xf32> to vector<8x256xf32>
    %13 = arith.addf %10, %12 : vector<8x256xf32>
    %cst_13 = arith.constant 0.000000e+00 : f32
    %14 = vector.broadcast %cst_13 : f32 to vector<8x256xf32>
    %15 = arith.maximumf %13, %14 : vector<8x256xf32>
    %c0_14 = arith.constant 0 : index
    %c0_15 = arith.constant 0 : index
    %16 = vector.load %arg9[%c0_14, %c0_15] : memref<256x64xf32, #tpu.memory_space<vmem>>, vector<256x64xf32>
    %cst_16 = arith.constant dense<0.000000e+00> : vector<8x64xf32>
    %17 = tpu.matmul %15, %16, %cst_16 {dimension_numbers = #tpu.dot_dimension_numbers<[1], [0], [0], [1], [0, 0, 1, 1], [], []>} : vector<8x256xf32>, vector<256x64xf32>, vector<8x64xf32> -> vector<8x64xf32>
    %c0_17 = arith.constant 0 : index
    %c0_18 = arith.constant 0 : index
    %18 = vector.load %arg10[%c0_17, %c0_18] : memref<1x64xf32, #tpu.memory_space<vmem>>, vector<1x64xf32>
    %19 = vector.broadcast %18 : vector<1x64xf32> to vector<8x64xf32>
    %20 = arith.addf %17, %19 : vector<8x64xf32>
    %cst_19 = arith.constant 0.000000e+00 : f32
    %21 = vector.broadcast %cst_19 : f32 to vector<8x64xf32>
    %22 = arith.maximumf %20, %21 : vector<8x64xf32>
    %c0_20 = arith.constant 0 : index
    %c0_21 = arith.constant 0 : index
    %23 = vector.load %arg11[%c0_20, %c0_21] : memref<64x16xf32, #tpu.memory_space<vmem>>, vector<64x16xf32>
    %cst_22 = arith.constant dense<0.000000e+00> : vector<8x16xf32>
    %24 = tpu.matmul %22, %23, %cst_22 {dimension_numbers = #tpu.dot_dimension_numbers<[1], [0], [0], [1], [0, 0, 1, 1], [], []>} : vector<8x64xf32>, vector<64x16xf32>, vector<8x16xf32> -> vector<8x16xf32>
    %c0_23 = arith.constant 0 : index
    %c0_24 = arith.constant 0 : index
    %25 = vector.load %arg12[%c0_23, %c0_24] : memref<1x16xf32, #tpu.memory_space<vmem>>, vector<1x16xf32>
    %26 = vector.broadcast %25 : vector<1x16xf32> to vector<8x16xf32>
    %27 = arith.addf %24, %26 : vector<8x16xf32>
    %c0_25 = arith.constant 0 : index
    %c0_26 = arith.constant 0 : index
    %28 = vector.load %arg13[%c0_25, %c0_26] : memref<64x16xf32, #tpu.memory_space<vmem>>, vector<64x16xf32>
    %cst_27 = arith.constant dense<0.000000e+00> : vector<8x16xf32>
    %29 = tpu.matmul %22, %28, %cst_27 {dimension_numbers = #tpu.dot_dimension_numbers<[1], [0], [0], [1], [0, 0, 1, 1], [], []>} : vector<8x64xf32>, vector<64x16xf32>, vector<8x16xf32> -> vector<8x16xf32>
    %c0_28 = arith.constant 0 : index
    %c0_29 = arith.constant 0 : index
    %30 = vector.load %arg14[%c0_28, %c0_29] : memref<1x16xf32, #tpu.memory_space<vmem>>, vector<1x16xf32>
    %31 = vector.broadcast %30 : vector<1x16xf32> to vector<8x16xf32>
    %32 = arith.addf %29, %31 : vector<8x16xf32>
    %cst_30 = arith.constant 5.000000e-01 : f32
    %33 = vector.broadcast %cst_30 : f32 to vector<8x16xf32>
    %34 = arith.mulf %33, %32 : vector<8x16xf32>
    %35 = math.exp %34 : vector<8x16xf32>
    %36 = arith.mulf %1, %35 : vector<8x16xf32>
    %37 = arith.addf %27, %36 : vector<8x16xf32>
    %c0_31 = arith.constant 0 : index
    %c0_32 = arith.constant 0 : index
    %38 = vector.load %arg4[%c0_31, %c0_32] : memref<6x40xf32, #tpu.memory_space<vmem>>, vector<6x40xf32>
    %c0_33 = arith.constant 0 : index
    %c0_34 = arith.constant 0 : index
    %39 = vector.load %arg26[%c0_33, %c0_34] : memref<6x16xf32, #tpu.memory_space<vmem>>, vector<6x16xf32>
    %c0_35 = arith.constant 0 : index
    %c0_36 = arith.constant 0 : index
    %40 = vector.load %arg15[%c0_35, %c0_36] : memref<40x512xf32, #tpu.memory_space<vmem>>, vector<40x512xf32>
    %cst_37 = arith.constant dense<0.000000e+00> : vector<6x512xf32>
    %41 = tpu.matmul %38, %40, %cst_37 {dimension_numbers = #tpu.dot_dimension_numbers<[1], [0], [0], [1], [0, 0, 1, 1], [], []>} : vector<6x40xf32>, vector<40x512xf32>, vector<6x512xf32> -> vector<6x512xf32>
    %c0_38 = arith.constant 0 : index
    %c0_39 = arith.constant 0 : index
    %42 = vector.load %arg16[%c0_38, %c0_39] : memref<1x512xf32, #tpu.memory_space<vmem>>, vector<1x512xf32>
    %43 = vector.broadcast %42 : vector<1x512xf32> to vector<6x512xf32>
    %44 = arith.addf %41, %43 : vector<6x512xf32>
    %cst_40 = arith.constant 0.000000e+00 : f32
    %45 = vector.broadcast %cst_40 : f32 to vector<6x512xf32>
    %46 = arith.maximumf %44, %45 : vector<6x512xf32>
    %c0_41 = arith.constant 0 : index
    %c0_42 = arith.constant 0 : index
    %47 = vector.load %arg17[%c0_41, %c0_42] : memref<512x256xf32, #tpu.memory_space<vmem>>, vector<512x256xf32>
    %cst_43 = arith.constant dense<0.000000e+00> : vector<6x256xf32>
    %48 = tpu.matmul %46, %47, %cst_43 {dimension_numbers = #tpu.dot_dimension_numbers<[1], [0], [0], [1], [0, 0, 1, 1], [], []>} : vector<6x512xf32>, vector<512x256xf32>, vector<6x256xf32> -> vector<6x256xf32>
    %c0_44 = arith.constant 0 : index
    %c0_45 = arith.constant 0 : index
    %49 = vector.load %arg18[%c0_44, %c0_45] : memref<1x256xf32, #tpu.memory_space<vmem>>, vector<1x256xf32>
    %50 = vector.broadcast %49 : vector<1x256xf32> to vector<6x256xf32>
    %51 = arith.addf %48, %50 : vector<6x256xf32>
    %cst_46 = arith.constant 0.000000e+00 : f32
    %52 = vector.broadcast %cst_46 : f32 to vector<6x256xf32>
    %53 = arith.maximumf %51, %52 : vector<6x256xf32>
    %c0_47 = arith.constant 0 : index
    %c0_48 = arith.constant 0 : index
    %54 = vector.load %arg19[%c0_47, %c0_48] : memref<256x64xf32, #tpu.memory_space<vmem>>, vector<256x64xf32>
    %cst_49 = arith.constant dense<0.000000e+00> : vector<6x64xf32>
    %55 = tpu.matmul %53, %54, %cst_49 {dimension_numbers = #tpu.dot_dimension_numbers<[1], [0], [0], [1], [0, 0, 1, 1], [], []>} : vector<6x256xf32>, vector<256x64xf32>, vector<6x64xf32> -> vector<6x64xf32>
    %c0_50 = arith.constant 0 : index
    %c0_51 = arith.constant 0 : index
    %56 = vector.load %arg20[%c0_50, %c0_51] : memref<1x64xf32, #tpu.memory_space<vmem>>, vector<1x64xf32>
    %57 = vector.broadcast %56 : vector<1x64xf32> to vector<6x64xf32>
    %58 = arith.addf %55, %57 : vector<6x64xf32>
    %cst_52 = arith.constant 0.000000e+00 : f32
    %59 = vector.broadcast %cst_52 : f32 to vector<6x64xf32>
    %60 = arith.maximumf %58, %59 : vector<6x64xf32>
    %c0_53 = arith.constant 0 : index
    %c0_54 = arith.constant 0 : index
    %61 = vector.load %arg21[%c0_53, %c0_54] : memref<64x16xf32, #tpu.memory_space<vmem>>, vector<64x16xf32>
    %cst_55 = arith.constant dense<0.000000e+00> : vector<6x16xf32>
    %62 = tpu.matmul %60, %61, %cst_55 {dimension_numbers = #tpu.dot_dimension_numbers<[1], [0], [0], [1], [0, 0, 1, 1], [], []>} : vector<6x64xf32>, vector<64x16xf32>, vector<6x16xf32> -> vector<6x16xf32>
    %c0_56 = arith.constant 0 : index
    %c0_57 = arith.constant 0 : index
    %63 = vector.load %arg22[%c0_56, %c0_57] : memref<1x16xf32, #tpu.memory_space<vmem>>, vector<1x16xf32>
    %64 = vector.broadcast %63 : vector<1x16xf32> to vector<6x16xf32>
    %65 = arith.addf %62, %64 : vector<6x16xf32>
    %c0_58 = arith.constant 0 : index
    %c0_59 = arith.constant 0 : index
    %66 = vector.load %arg23[%c0_58, %c0_59] : memref<64x16xf32, #tpu.memory_space<vmem>>, vector<64x16xf32>
    %cst_60 = arith.constant dense<0.000000e+00> : vector<6x16xf32>
    %67 = tpu.matmul %60, %66, %cst_60 {dimension_numbers = #tpu.dot_dimension_numbers<[1], [0], [0], [1], [0, 0, 1, 1], [], []>} : vector<6x64xf32>, vector<64x16xf32>, vector<6x16xf32> -> vector<6x16xf32>
    %c0_61 = arith.constant 0 : index
    %c0_62 = arith.constant 0 : index
    %68 = vector.load %arg24[%c0_61, %c0_62] : memref<1x16xf32, #tpu.memory_space<vmem>>, vector<1x16xf32>
    %69 = vector.broadcast %68 : vector<1x16xf32> to vector<6x16xf32>
    %70 = arith.addf %67, %69 : vector<6x16xf32>
    %cst_63 = arith.constant 5.000000e-01 : f32
    %71 = vector.broadcast %cst_63 : f32 to vector<6x16xf32>
    %72 = arith.mulf %71, %70 : vector<6x16xf32>
    %73 = math.exp %72 : vector<6x16xf32>
    %74 = arith.mulf %39, %73 : vector<6x16xf32>
    %75 = arith.addf %65, %74 : vector<6x16xf32>
    %c0_64 = arith.constant 0 : index
    %c0_65 = arith.constant 0 : index
    %76 = vector.load %arg28[%c0_64, %c0_65] : memref<8x16xf32, #tpu.memory_space<vmem>>, vector<8x16xf32>
    tpu.vector_store %arg28[%c0_64, %c0_65], %37 {strides = array<i32>} : memref<8x16xf32, #tpu.memory_space<vmem>>, vector<8x16xf32>,
    %c0_66 = arith.constant 0 : index
    %c0_67 = arith.constant 0 : index
    %77 = vector.load %arg29[%c0_66, %c0_67] : memref<6x16xf32, #tpu.memory_space<vmem>>, vector<6x16xf32>
    tpu.vector_store %arg29[%c0_66, %c0_67], %75 {strides = array<i32>} : memref<6x16xf32, #tpu.memory_space<vmem>>, vector<6x16xf32>,
    %78 = arith.mulf %37, %37 : vector<8x16xf32>
    %cst_68 = arith.constant dense<0.000000e+00> : vector<8xf32>
    %79 = vector.multi_reduction <add>, %78, %cst_68 [1] : vector<8x16xf32> to vector<8xf32>
    %80 = vector.shape_cast %79 : vector<8xf32> to vector<8x1xf32>
    %cst_69 = arith.constant 1.000000e-24 : f32
    %81 = vector.broadcast %cst_69 : f32 to vector<8x1xf32>
    %82 = arith.maximumf %80, %81 : vector<8x1xf32>
    %83 = math.rsqrt %82 : vector<8x1xf32>
    %84 = arith.mulf %75, %75 : vector<6x16xf32>
    %cst_70 = arith.constant dense<0.000000e+00> : vector<6xf32>
    %85 = vector.multi_reduction <add>, %84, %cst_70 [1] : vector<6x16xf32> to vector<6xf32>
    %86 = vector.shape_cast %85 : vector<6xf32> to vector<6x1xf32>
    %cst_71 = arith.constant 1.000000e-24 : f32
    %87 = vector.broadcast %cst_71 : f32 to vector<6x1xf32>
    %88 = arith.maximumf %86, %87 : vector<6x1xf32>
    %89 = math.rsqrt %88 : vector<6x1xf32>
    %90 = vector.broadcast %83 : vector<8x1xf32> to vector<8x16xf32>
    %91 = arith.mulf %37, %90 : vector<8x16xf32>
    %92 = vector.broadcast %89 : vector<6x1xf32> to vector<6x16xf32>
    %93 = arith.mulf %75, %92 : vector<6x16xf32>
    %cst_72 = arith.constant dense<0.000000e+00> : vector<8x6xf32>
    %94 = tpu.matmul %91, %93, %cst_72 {dimension_numbers = #tpu.dot_dimension_numbers<[1], [1], [0], [0], [0, 0, 1, 0], [], []>} : vector<8x16xf32>, vector<6x16xf32>, vector<8x6xf32> -> vector<8x6xf32>
    %95 = tpu.iota {dimensions = array<i32: 1>} : vector<8x8xi32>
    %96 = tpu.iota {dimensions = array<i32: 1>} : vector<8x6xi32>
    %c0_73 = arith.constant 0 : index
    %c0_74 = arith.constant 0 : index
    %97 = vector.load %arg0[%c0_73, %c0_74] : memref<8x1xi32, #tpu.memory_space<vmem>>, vector<8x1xi32>
    %98 = vector.broadcast %97 : vector<8x1xi32> to vector<8x8xi32>
    %99 = arith.cmpi eq, %95, %98 : vector<8x8xi32>
    %100 = arith.extui %99 : vector<8x8xi1> to vector<8x8xi32>
    %101 = arith.sitofp %100 : vector<8x8xi32> to vector<8x8xf32>
    %c0_75 = arith.constant 0 : index
    %c0_76 = arith.constant 0 : index
    %102 = vector.load %arg1[%c0_75, %c0_76] : memref<8x1xi32, #tpu.memory_space<vmem>>, vector<8x1xi32>
    %103 = vector.broadcast %102 : vector<8x1xi32> to vector<8x6xi32>
    %104 = arith.cmpi eq, %96, %103 : vector<8x6xi32>
    %105 = arith.extui %104 : vector<8x6xi1> to vector<8x6xi32>
    %106 = arith.sitofp %105 : vector<8x6xi32> to vector<8x6xf32>
    %c0_77 = arith.constant 0 : index
    %c0_78 = arith.constant 0 : index
    %107 = vector.load %arg2[%c0_77, %c0_78] : memref<8x1xi32, #tpu.memory_space<vmem>>, vector<8x1xi32>
    %108 = vector.broadcast %107 : vector<8x1xi32> to vector<8x6xi32>
    %109 = arith.cmpi eq, %96, %108 : vector<8x6xi32>
    %110 = arith.extui %109 : vector<8x6xi1> to vector<8x6xi32>
    %111 = arith.sitofp %110 : vector<8x6xi32> to vector<8x6xf32>
    %cst_79 = arith.constant dense<0.000000e+00> : vector<8x6xf32>
    %112 = tpu.matmul %101, %94, %cst_79 {dimension_numbers = #tpu.dot_dimension_numbers<[1], [0], [0], [1], [0, 0, 1, 1], [], []>} : vector<8x8xf32>, vector<8x6xf32>, vector<8x6xf32> -> vector<8x6xf32>
    %113 = arith.mulf %112, %106 : vector<8x6xf32>
    %cst_80 = arith.constant dense<0.000000e+00> : vector<8xf32>
    %114 = vector.multi_reduction <add>, %113, %cst_80 [1] : vector<8x6xf32> to vector<8xf32>
    %115 = vector.shape_cast %114 : vector<8xf32> to vector<8x1xf32>
    %116 = arith.mulf %112, %111 : vector<8x6xf32>
    %cst_81 = arith.constant dense<0.000000e+00> : vector<8xf32>
    %117 = vector.multi_reduction <add>, %116, %cst_81 [1] : vector<8x6xf32> to vector<8xf32>
    %118 = vector.shape_cast %117 : vector<8xf32> to vector<8x1xf32>
    %cst_82 = arith.constant 1.000000e+00 : f32
    %119 = vector.broadcast %cst_82 : f32 to vector<8x1xf32>
    %120 = arith.mulf %115, %119 : vector<8x1xf32>
    %121 = math.exp %120 : vector<8x1xf32>
    %cst_83 = arith.constant 1.000000e+00 : f32
    %122 = vector.broadcast %cst_83 : f32 to vector<8x1xf32>
    %123 = arith.mulf %118, %122 : vector<8x1xf32>
    %124 = math.exp %123 : vector<8x1xf32>
    %cst_84 = arith.constant 2.000000e+00 : f32
    %125 = vector.broadcast %cst_84 : f32 to vector<8x1xf32>
    %126 = arith.mulf %125, %124 : vector<8x1xf32>
    %cst_85 = arith.constant 2.000000e+00 : f32
    %127 = vector.broadcast %cst_85 : f32 to vector<8x1xf32>
    %128 = arith.mulf %127, %121 : vector<8x1xf32>
    %cst_86 = arith.constant 2.000000e+00 : f32
    %129 = vector.broadcast %cst_86 : f32 to vector<8x1xf32>
    %130 = arith.mulf %129, %121 : vector<8x1xf32>
    %131 = arith.addf %130, %126 : vector<8x1xf32>
    %132 = arith.divf %128, %131 : vector<8x1xf32>
    %133 = math.log %132 : vector<8x1xf32>
    %cst_87 = arith.constant 0.000000e+00 : f32
    %134 = vector.broadcast %cst_87 : f32 to vector<8x1xf32>
    %135 = arith.subf %134, %133 : vector<8x1xf32>
    %cst_88 = arith.constant 1.000000e+00 : f32
    %136 = vector.broadcast %cst_88 : f32 to vector<8x1xf32>
    %137 = arith.addf %115, %136 : vector<8x1xf32>
    %cst_89 = arith.constant 5.000000e-01 : f32
    %138 = vector.broadcast %cst_89 : f32 to vector<8x1xf32>
    %139 = arith.mulf %137, %138 : vector<8x1xf32>
    %cst_90 = arith.constant 1.000000e+00 : f32
    %140 = vector.broadcast %cst_90 : f32 to vector<8x1xf32>
    %141 = arith.subf %139, %140 : vector<8x1xf32>
    %142 = math.absf %141 : vector<8x1xf32>
    %cst_91 = arith.constant 1.000000e+00 : f32
    %143 = vector.broadcast %cst_91 : f32 to vector<8x1xf32>
    %144 = arith.addf %118, %143 : vector<8x1xf32>
    %145 = arith.addf %142, %144 : vector<8x1xf32>
    %146 = arith.addf %135, %145 : vector<8x1xf32>
    %147 = vector.shape_cast %146 : vector<8x1xf32> to vector<1x8x1xf32>
    %cst_92 = arith.constant dense<0.000000e+00> : vector<1xf32>
    %148 = vector.multi_reduction <add>, %147, %cst_92 [1, 2] : vector<1x8x1xf32> to vector<1xf32>
    %149 = vector.shape_cast %148 : vector<1xf32> to vector<1x1x1xf32>
    %150 = vector.extract %149[0, 0, 0] : f32 from vector<1x1x1xf32>
    %cst_93 = arith.constant 8.000000e+00 : f32
    %151 = arith.divf %150, %cst_93 : f32
    %c0_94 = arith.constant 0 : index
    %c0_95 = arith.constant 0 : index
    %152 = memref.load %arg27[%c0_94, %c0_95] : memref<1x1xf32, #tpu.memory_space<smem>>
    memref.store %151, %arg27[%c0_94, %c0_95] : memref<1x1xf32, #tpu.memory_space<smem>>
    return
  }
}

</mosaic_0001>

<llo_original>
// kernel: tpu_custom_call.1
$region0: #{tpu_custom_call.1}
  #allocation0 [shape = 'u32[]', space=smem, size = 0x4, offset = 0x4, fixed_abs, tag = 'smem constant byte address 0x4 - core index']
  #allocation1 [shape = 'u32[144,128]{1,0:T(1,128)}', space=vmem, size = 0x12000, scoped, tag = 'internal scratch']
  %s0 = inlined_call_operand.smem [shape: u32[30], index: -1, kind: input, shape index: {}]
  %s1 = sld [smem:[%s0]]
  %s2 = scalar_lea.smem %s0, 1
  %s3 = sld [smem:[%s2]]
  %s4 = scalar_lea.smem %s0, 2
  %s5 = sld [smem:[%s4]]
  %s6 = scalar_lea.smem %s0, 3
  %s7 = sld [smem:[%s6]]
  %s8 = scalar_lea.smem %s0, 4
  %s9 = sld [smem:[%s8]]
  %s10 = scalar_lea.smem %s0, 5
  %s11 = sld [smem:[%s10]]
  %s12 = scalar_lea.smem %s0, 6
  %s13 = sld [smem:[%s12]]
  %s14 = scalar_lea.smem %s0, 7
  %s15 = sld [smem:[%s14]]
  %s16 = scalar_lea.smem %s0, 8
  %s17 = sld [smem:[%s16]]
  %s18 = scalar_lea.smem %s0, 9
  %s19 = sld [smem:[%s18]]
  %s20 = scalar_lea.smem %s0, 10
  %s21 = sld [smem:[%s20]]
  %s22 = scalar_lea.smem %s0, 11
  %s23 = sld [smem:[%s22]]
  %s24 = scalar_lea.smem %s0, 12
  %s25 = sld [smem:[%s24]]
  %s26 = scalar_lea.smem %s0, 13
  %s27 = sld [smem:[%s26]]
  %s28 = scalar_lea.smem %s0, 14
  %s29 = sld [smem:[%s28]]
  %s30 = scalar_lea.smem %s0, 15
  %s31 = sld [smem:[%s30]]
  %s32 = scalar_lea.smem %s0, 16
  %s33 = sld [smem:[%s32]]
  %s34 = scalar_lea.smem %s0, 17
  %s35 = sld [smem:[%s34]]
  %s36 = scalar_lea.smem %s0, 18
  %s37 = sld [smem:[%s36]]
  %s38 = scalar_lea.smem %s0, 19
  %s39 = sld [smem:[%s38]]
  %s40 = scalar_lea.smem %s0, 20
  %s41 = sld [smem:[%s40]]
  %s42 = scalar_lea.smem %s0, 21
  %s43 = sld [smem:[%s42]]
  %s44 = scalar_lea.smem %s0, 22
  %s45 = sld [smem:[%s44]]
  %s46 = scalar_lea.smem %s0, 23
  %s47 = sld [smem:[%s46]]
  %s48 = scalar_lea.smem %s0, 24
  %s49 = sld [smem:[%s48]]
  %s50 = scalar_lea.smem %s0, 25
  %s51 = sld [smem:[%s50]]
  %s52 = scalar_lea.smem %s0, 26
  %s53 = sld [smem:[%s52]]
  %s54 = scalar_lea.smem %s0, 27
  %s55 = sld [smem:[%s54]]
  %s56 = scalar_lea.smem %s0, 28
  %s57 = sld [smem:[%s56]]
  %s58 = scalar_lea.smem %s0, 29
  %s59 = sld [smem:[%s58]]
  %60 = xla_tuple %s55, %s57, %s59
  %s61 = sld [smem:[#allocation0]]
  $region190: #{tpu_custom_call.1} parent=0
    _
  %s63 = ssub.s32 1, %s61
  %s64 = scalar_select 0, %s63, %s61
  $region1: #{tpu_custom_call.1} parent=0
    #allocation2 [shape = 'u8[4096]{0}', space=vmem, size = 0x1000, scoped, tag = 'input window, operand 3, single buffered']
    #allocation3 [shape = 's32[1]{0}', space=sflag, size = 0x4, scoped, tag = 'scoped memory for tpu_custom_call.1']
    #allocation4 [shape = 's32[1]{0}', space=sflag, size = 0x4, scoped, tag = 'scoped memory for tpu_custom_call.1']
    #allocation5 [shape = 's32[1]{0}', space=sflag, size = 0x4, scoped, tag = 'scoped memory for tpu_custom_call.1']
    #allocation6 [shape = 'u8[4096]{0}', space=vmem, size = 0x1000, scoped, tag = 'input window, operand 4, single buffered']
    #allocation7 [shape = 's32[1]{0}', space=sflag, size = 0x4, scoped, tag = 'scoped memory for tpu_custom_call.1']
    #allocation8 [shape = 'u8[98304]{0}', space=vmem, size = 0x18000, scoped, tag = 'input window, operand 5, single buffered']
    #allocation9 [shape = 'u8[2048]{0}', space=vmem, size = 0x800, scoped, tag = 'input window, operand 6, single buffered']
    #allocation10 [shape = 's32[1]{0}', space=sflag, size = 0x4, scoped, tag = 'scoped memory for tpu_custom_call.1']
    #allocation11 [shape = 'u8[512]{0}', space=vmem, size = 0x400, scoped, tag = 'input window, operand 10, single buffered']
    #allocation12 [shape = 'u8[512]{0}', space=vmem, size = 0x400, scoped, tag = 'input window, operand 12, single buffered']
    #allocation13 [shape = 's32[1]{0}', space=sflag, size = 0x4, scoped, tag = 'scoped memory for tpu_custom_call.1']
    #allocation14 [shape = 'u8[512]{0}', space=vmem, size = 0x400, scoped, tag = 'input window, operand 14, single buffered']
    #allocation15 [shape = 'u8[81920]{0}', space=vmem, size = 0x14000, scoped, tag = 'input window, operand 15, single buffered']
    #allocation16 [shape = 's32[1]{0}', space=sflag, size = 0x4, scoped, tag = 'scoped memory for tpu_custom_call.1']
    #allocation17 [shape = 'u8[2048]{0}', space=vmem, size = 0x800, scoped, tag = 'input window, operand 16, single buffered']
    #allocation18 [shape = 'u8[524288]{0}', space=vmem, size = 0x80000, scoped, tag = 'input window, operand 17, single buffered']
    #allocation19 [shape = 's32[1]{0}', space=sflag, size = 0x4, scoped, tag = 'scoped memory for tpu_custom_call.1']
    #allocation20 [shape = 'u8[1024]{0}', space=vmem, size = 0x400, scoped, tag = 'input window, operand 18, single buffered']
    #allocation21 [shape = 'u8[512]{0}', space=vmem, size = 0x400, scoped, tag = 'input window, operand 20, single buffered']
    #allocation22 [shape = 's32[1]{0}', space=sflag, size = 0x4, scoped, tag = 'scoped memory for tpu_custom_call.1']
    #allocation23 [shape = 'u8[512]{0}', space=vmem, size = 0x400, scoped, tag = 'input window, operand 22, single buffered']
    #allocation24 [shape = 'u8[512]{0}', space=vmem, size = 0x400, scoped, tag = 'input window, operand 24, single buffered']
    #allocation25 [shape = 's32[1]{0}', space=sflag, size = 0x4, scoped, tag = 'scoped memory for tpu_custom_call.1']
    #allocation26 [shape = 'u8[512]{0}', space=smem, size = 0x200, scoped, tag = 'output window, operand 0, single buffered']
    #allocation27 [shape = 'u8[4096]{0}', space=vmem, size = 0x1000, scoped, tag = 'output window, operand 1, single buffered']
    #allocation28 [shape = 'u8[4096]{0}', space=vmem, size = 0x1000, scoped, tag = 'output window, operand 2, single buffered']
    #allocation29 [shape = 's32[1]{0}', space=sflag, size = 0x4, scoped, tag = 'scoped memory for tpu_custom_call.1']
    %65 = vsyncpa [#allocation3], 0
    %66 = vsyncpa [#allocation7], 0
    %67 = vsyncpa [#allocation10], 0
    %68 = vsyncpa [#allocation13], 0
    %69 = vsyncpa [#allocation16], 0
    %70 = vsyncpa [#allocation19], 0
    %71 = vsyncpa [#allocation22], 0
    %72 = vsyncpa [#allocation25], 0
    %73 = vsyncpa [#allocation5], 0
    %74 = vsyncpa [#allocation4], 0
    %75 = vsyncpa [#allocation29], 0
    // Predicated region
    $region2: #{tpu_custom_call.1} parent=1 // pred_check
      _
    $region3: #{tpu_custom_call.1} parent=1 // pred_check_branch
      %77 = sbr.rel (0) target = $region5
    $region4: #{tpu_custom_call.1} parent=1 // pred_region
      _
    $region5: #{tpu_custom_call.1} parent=1 // pred_fallthru
      _
    // Predicated region
    $region6: #{tpu_custom_call.1} parent=1 // pred_check
      _
    $region7: #{tpu_custom_call.1} parent=1 // pred_check_branch
      %79 = sbr.rel (0) target = $region9
    $region8: #{tpu_custom_call.1} parent=1 // pred_region
      _
    $region9: #{tpu_custom_call.1} parent=1 // pred_fallthru
      _
    // Predicated region
    $region10: #{tpu_custom_call.1} parent=1 // pred_check
      _
    $region11: #{tpu_custom_call.1} parent=1 // pred_check_branch
      %81 = sbr.rel (0) target = $region13
    $region12: #{tpu_custom_call.1} parent=1 // pred_region
      _
    $region13: #{tpu_custom_call.1} parent=1 // pred_fallthru
      _
    // Predicated region
    $region14: #{tpu_custom_call.1} parent=1 // pred_check
      _
    $region15: #{tpu_custom_call.1} parent=1 // pred_check_branch
      %83 = sbr.rel (0) target = $region17
    $region16: #{tpu_custom_call.1} parent=1 // pred_region
      %s85 = ssub.s32 128, 128
      %86 = vsyncadd [#allocation3], %s85
      %s88 = sshll.u32 [#allocation2], 4
      %s89 = int_to_ptr.vmem [resolvable:$true] %s88
      %91 = dma.hbm_to_vmem [thread:$0]  %s7, 128, %s89, [#allocation3]
    $region17: #{tpu_custom_call.1} parent=1 // pred_fallthru
      _
    // Predicated region
    $region18: #{tpu_custom_call.1} parent=1 // pred_check
      _
    $region19: #{tpu_custom_call.1} parent=1 // pred_check_branch
      %93 = sbr.rel (0) target = $region21
    $region20: #{tpu_custom_call.1} parent=1 // pred_region
      %s95 = ssub.s32 128, 128
      %96 = vsyncadd [#allocation7], %s95
      %s98 = sshll.u32 [#allocation6], 4
      %s99 = int_to_ptr.vmem [resolvable:$true] %s98
      %101 = dma.hbm_to_vmem [thread:$0]  %s9, 128, %s99, [#allocation7]
    $region21: #{tpu_custom_call.1} parent=1 // pred_fallthru
      _
    // Predicated region
    $region22: #{tpu_custom_call.1} parent=1 // pred_check
      _
    $region23: #{tpu_custom_call.1} parent=1 // pred_check_branch
      %103 = sbr.rel (0) target = $region25
    $region24: #{tpu_custom_call.1} parent=1 // pred_region
      %s105 = ssub.s32 3072, 3072
      %106 = vsyncadd [#allocation7], %s105
      %s107 = sshll.u32 [#allocation8], 4
      %s108 = int_to_ptr.vmem [resolvable:$true] %s107
      %113 = dma.hbm_to_vmem [thread:$0]  %s11, 3072, %s108, [#allocation7], 512, 512, 32
    $region25: #{tpu_custom_call.1} parent=1 // pred_fallthru
      _
    // Predicated region
    $region26: #{tpu_custom_call.1} parent=1 // pred_check
      _
    $region27: #{tpu_custom_call.1} parent=1 // pred_check_branch
      %115 = sbr.rel (0) target = $region29
    $region28: #{tpu_custom_call.1} parent=1 // pred_region
      %s117 = ssub.s32 64, 64
      %118 = vsyncadd [#allocation10], %s117
      %s120 = sshll.u32 [#allocation9], 4
      %s121 = int_to_ptr.vmem [resolvable:$true] %s120
      %123 = dma.hbm_to_vmem [thread:$0]  %s13, 64, %s121, [#allocation10]
    $region29: #{tpu_custom_call.1} parent=1 // pred_fallthru
      _
    // Predicated region
    $region30: #{tpu_custom_call.1} parent=1 // pred_check
      _
    $region31: #{tpu_custom_call.1} parent=1 // pred_check_branch
      %125 = sbr.rel (0) target = $region33
    $region32: #{tpu_custom_call.1} parent=1 // pred_region
      _
    $region33: #{tpu_custom_call.1} parent=1 // pred_fallthru
      _
    // Predicated region
    $region34: #{tpu_custom_call.1} parent=1 // pred_check
      _
    $region35: #{tpu_custom_call.1} parent=1 // pred_check_branch
      %127 = sbr.rel (0) target = $region37
    $region36: #{tpu_custom_call.1} parent=1 // pred_region
      _
    $region37: #{tpu_custom_call.1} parent=1 // pred_fallthru
      _
    // Predicated region
    $region38: #{tpu_custom_call.1} parent=1 // pred_check
      _
    $region39: #{tpu_custom_call.1} parent=1 // pred_check_branch
      %129 = sbr.rel (0) target = $region41
    $region40: #{tpu_custom_call.1} parent=1 // pred_region
      _
    $region41: #{tpu_custom_call.1} parent=1 // pred_fallthru
      _
    // Predicated region
    $region42: #{tpu_custom_call.1} parent=1 // pred_check
      _
    $region43: #{tpu_custom_call.1} parent=1 // pred_check_branch
      %131 = sbr.rel (0) target = $region45
    $region44: #{tpu_custom_call.1} parent=1 // pred_region
      %s133 = ssub.s32 16, 16
      %134 = vsyncadd [#allocation10], %s133
      %s136 = sshll.u32 [#allocation11], 4
      %s137 = int_to_ptr.vmem [resolvable:$true] %s136
      %139 = dma.hbm_to_vmem [thread:$0]  %s21, 16, %s137, [#allocation10]
    $region45: #{tpu_custom_call.1} parent=1 // pred_fallthru
      _
    // Predicated region
    $region46: #{tpu_custom_call.1} parent=1 // pred_check
      _
    $region47: #{tpu_custom_call.1} parent=1 // pred_check_branch
      %141 = sbr.rel (0) target = $region49
    $region48: #{tpu_custom_call.1} parent=1 // pred_region
      _
    $region49: #{tpu_custom_call.1} parent=1 // pred_fallthru
      _
    // Predicated region
    $region50: #{tpu_custom_call.1} parent=1 // pred_check
      _
    $region51: #{tpu_custom_call.1} parent=1 // pred_check_branch
      %143 = sbr.rel (0) target = $region53
    $region52: #{tpu_custom_call.1} parent=1 // pred_region
      %s145 = ssub.s32 16, 16
      %146 = vsyncadd [#allocation13], %s145
      %s148 = sshll.u32 [#allocation12], 4
      %s149 = int_to_ptr.vmem [resolvable:$true] %s148
      %151 = dma.hbm_to_vmem [thread:$0]  %s25, 16, %s149, [#allocation13]
    $region53: #{tpu_custom_call.1} parent=1 // pred_fallthru
      _
    // Predicated region
    $region54: #{tpu_custom_call.1} parent=1 // pred_check
      _
    $region55: #{tpu_custom_call.1} parent=1 // pred_check_branch
      %153 = sbr.rel (0) target = $region57
    $region56: #{tpu_custom_call.1} parent=1 // pred_region
      _
    $region57: #{tpu_custom_call.1} parent=1 // pred_fallthru
      _
    // Predicated region
    $region58: #{tpu_custom_call.1} parent=1 // pred_check
      _
    $region59: #{tpu_custom_call.1} parent=1 // pred_check_branch
      %155 = sbr.rel (0) target = $region61
    $region60: #{tpu_custom_call.1} parent=1 // pred_region
      %s157 = ssub.s32 16, 16
      %158 = vsyncadd [#allocation13], %s157
      %s160 = sshll.u32 [#allocation14], 4
      %s161 = int_to_ptr.vmem [resolvable:$true] %s160
      %163 = dma.hbm_to_vmem [thread:$0]  %s29, 16, %s161, [#allocation13]
    $region61: #{tpu_custom_call.1} parent=1 // pred_fallthru
      _
    // Predicated region
    $region62: #{tpu_custom_call.1} parent=1 // pred_check
      _
    $region63: #{tpu_custom_call.1} parent=1 // pred_check_branch
      %165 = sbr.rel (0) target = $region65
    $region64: #{tpu_custom_call.1} parent=1 // pred_region
      %s167 = ssub.s32 2560, 2560
      %168 = vsyncadd [#allocation16], %s167
      %s169 = sshll.u32 [#allocation15], 4
      %s170 = int_to_ptr.vmem [resolvable:$true] %s169
      %175 = dma.hbm_to_vmem [thread:$0]  %s31, 2560, %s170, [#allocation16], 512, 512, 32
    $region65: #{tpu_custom_call.1} parent=1 // pred_fallthru
      _
    // Predicated region
    $region66: #{tpu_custom_call.1} parent=1 // pred_check
      _
    $region67: #{tpu_custom_call.1} parent=1 // pred_check_branch
      %177 = sbr.rel (0) target = $region69
    $region68: #{tpu_custom_call.1} parent=1 // pred_region
      %s179 = ssub.s32 64, 64
      %180 = vsyncadd [#allocation16], %s179
      %s182 = sshll.u32 [#allocation17], 4
      %s183 = int_to_ptr.vmem [resolvable:$true] %s182
      %185 = dma.hbm_to_vmem [thread:$0]  %s33, 64, %s183, [#allocation16]
    $region69: #{tpu_custom_call.1} parent=1 // pred_fallthru
      _
    // Predicated region
    $region70: #{tpu_custom_call.1} parent=1 // pred_check
      _
    $region71: #{tpu_custom_call.1} parent=1 // pred_check_branch
      %187 = sbr.rel (0) target = $region73
    $region72: #{tpu_custom_call.1} parent=1 // pred_region
      %s189 = ssub.s32 16384, 16384
      %190 = vsyncadd [#allocation19], %s189
      %s191 = sshll.u32 [#allocation18], 4
      %s192 = int_to_ptr.vmem [resolvable:$true] %s191
      %197 = dma.hbm_to_vmem [thread:$0]  %s35, 16384, %s192, [#allocation19], 256, 256, 16
    $region73: #{tpu_custom_call.1} parent=1 // pred_fallthru
      _
    // Predicated region
    $region74: #{tpu_custom_call.1} parent=1 // pred_check
      _
    $region75: #{tpu_custom_call.1} parent=1 // pred_check_branch
      %199 = sbr.rel (0) target = $region77
    $region76: #{tpu_custom_call.1} parent=1 // pred_region
      %s201 = ssub.s32 32, 32
      %202 = vsyncadd [#allocation19], %s201
      %s204 = sshll.u32 [#allocation20], 4
      %s205 = int_to_ptr.vmem [resolvable:$true] %s204
      %207 = dma.hbm_to_vmem [thread:$0]  %s37, 32, %s205, [#allocation19]
    $region77: #{tpu_custom_call.1} parent=1 // pred_fallthru
      _
    // Predicated region
    $region78: #{tpu_custom_call.1} parent=1 // pred_check
      _
    $region79: #{tpu_custom_call.1} parent=1 // pred_check_branch
      %209 = sbr.rel (0) target = $region81
    $region80: #{tpu_custom_call.1} parent=1 // pred_region
      _
    $region81: #{tpu_custom_call.1} parent=1 // pred_fallthru
      _
    // Predicated region
    $region82: #{tpu_custom_call.1} parent=1 // pred_check
      _
    $region83: #{tpu_custom_call.1} parent=1 // pred_check_branch
      %211 = sbr.rel (0) target = $region85
    $region84: #{tpu_custom_call.1} parent=1 // pred_region
      %s213 = ssub.s32 16, 16
      %214 = vsyncadd [#allocation22], %s213
      %s216 = sshll.u32 [#allocation21], 4
      %s217 = int_to_ptr.vmem [resolvable:$true] %s216
      %219 = dma.hbm_to_vmem [thread:$0]  %s41, 16, %s217, [#allocation22]
    $region85: #{tpu_custom_call.1} parent=1 // pred_fallthru
      _
    // Predicated region
    $region86: #{tpu_custom_call.1} parent=1 // pred_check
      _
    $region87: #{tpu_custom_call.1} parent=1 // pred_check_branch
      %221 = sbr.rel (0) target = $region89
    $region88: #{tpu_custom_call.1} parent=1 // pred_region
      _
    $region89: #{tpu_custom_call.1} parent=1 // pred_fallthru
      _
    // Predicated region
    $region90: #{tpu_custom_call.1} parent=1 // pred_check
      _
    $region91: #{tpu_custom_call.1} parent=1 // pred_check_branch
      %223 = sbr.rel (0) target = $region93
    $region92: #{tpu_custom_call.1} parent=1 // pred_region
      %s225 = ssub.s32 16, 16
      %226 = vsyncadd [#allocation22], %s225
      %s228 = sshll.u32 [#allocation23], 4
      %s229 = int_to_ptr.vmem [resolvable:$true] %s228
      %231 = dma.hbm_to_vmem [thread:$0]  %s45, 16, %s229, [#allocation22]
    $region93: #{tpu_custom_call.1} parent=1 // pred_fallthru
      _
    // Predicated region
    $region94: #{tpu_custom_call.1} parent=1 // pred_check
      _
    $region95: #{tpu_custom_call.1} parent=1 // pred_check_branch
      %233 = sbr.rel (0) target = $region97
    $region96: #{tpu_custom_call.1} parent=1 // pred_region
      _
    $region97: #{tpu_custom_call.1} parent=1 // pred_fallthru
      _
    // Predicated region
    $region98: #{tpu_custom_call.1} parent=1 // pred_check
      _
    $region99: #{tpu_custom_call.1} parent=1 // pred_check_branch
      %235 = sbr.rel (0) target = $region101
    $region100: #{tpu_custom_call.1} parent=1 // pred_region
      %s237 = ssub.s32 16, 16
      %238 = vsyncadd [#allocation25], %s237
      %s240 = sshll.u32 [#allocation24], 4
      %s241 = int_to_ptr.vmem [resolvable:$true] %s240
      %243 = dma.hbm_to_vmem [thread:$0]  %s49, 16, %s241, [#allocation25]
    $region101: #{tpu_custom_call.1} parent=1 // pred_fallthru
      _
    // Predicated region
    $region102: #{tpu_custom_call.1} parent=1 // pred_check
      _
    $region103: #{tpu_custom_call.1} parent=1 // pred_check_branch
      %245 = sbr.rel (0) target = $region105
    $region104: #{tpu_custom_call.1} parent=1 // pred_region
      _
    $region105: #{tpu_custom_call.1} parent=1 // pred_fallthru
      _
    // Predicated region
    $region106: #{tpu_custom_call.1} parent=1 // pred_check
      _
    $region107: #{tpu_custom_call.1} parent=1 // pred_check_branch
      %247 = sbr.rel (0) target = $region109
    $region108: #{tpu_custom_call.1} parent=1 // pred_region
      _
    $region109: #{tpu_custom_call.1} parent=1 // pred_fallthru
      _
    // Predicated region
    $region110: #{tpu_custom_call.1} parent=1 // pred_check
      _
    $region111: #{tpu_custom_call.1} parent=1 // pred_check_branch
      %249 = sbr.rel (0) target = $region113
    $region112: #{tpu_custom_call.1} parent=1 // pred_region
      %250 = dma.done [#allocation3], 128
    $region113: #{tpu_custom_call.1} parent=1 // pred_fallthru
      _
    // Predicated region
    $region114: #{tpu_custom_call.1} parent=1 // pred_check
      _
    $region115: #{tpu_custom_call.1} parent=1 // pred_check_branch
      %252 = sbr.rel (0) target = $region117
    $region116: #{tpu_custom_call.1} parent=1 // pred_region
      %253 = dma.done [#allocation7], 128
    $region117: #{tpu_custom_call.1} parent=1 // pred_fallthru
      _
    // Predicated region
    $region118: #{tpu_custom_call.1} parent=1 // pred_check
      _
    $region119: #{tpu_custom_call.1} parent=1 // pred_check_branch
      %255 = sbr.rel (0) target = $region121
    $region120: #{tpu_custom_call.1} parent=1 // pred_region
      %256 = dma.done [#allocation7], 3072
    $region121: #{tpu_custom_call.1} parent=1 // pred_fallthru
      _
    // Predicated region
    $region122: #{tpu_custom_call.1} parent=1 // pred_check
      _
    $region123: #{tpu_custom_call.1} parent=1 // pred_check_branch
      %258 = sbr.rel (0) target = $region125
    $region124: #{tpu_custom_call.1} parent=1 // pred_region
      %259 = dma.done [#allocation10], 64
    $region125: #{tpu_custom_call.1} parent=1 // pred_fallthru
      _
    // Predicated region
    $region126: #{tpu_custom_call.1} parent=1 // pred_check
      _
    $region127: #{tpu_custom_call.1} parent=1 // pred_check_branch
      %261 = sbr.rel (0) target = $region129
    $region128: #{tpu_custom_call.1} parent=1 // pred_region
      %262 = dma.done [#allocation10], 16
    $region129: #{tpu_custom_call.1} parent=1 // pred_fallthru
      _
    // Predicated region
    $region130: #{tpu_custom_call.1} parent=1 // pred_check
      _
    $region131: #{tpu_custom_call.1} parent=1 // pred_check_branch
      %264 = sbr.rel (0) target = $region133
    $region132: #{tpu_custom_call.1} parent=1 // pred_region
      %265 = dma.done [#allocation13], 16
    $region133: #{tpu_custom_call.1} parent=1 // pred_fallthru
      _
    // Predicated region
    $region134: #{tpu_custom_call.1} parent=1 // pred_check
      _
    $region135: #{tpu_custom_call.1} parent=1 // pred_check_branch
      %267 = sbr.rel (0) target = $region137
    $region136: #{tpu_custom_call.1} parent=1 // pred_region
      %268 = dma.done [#allocation13], 16
    $region137: #{tpu_custom_call.1} parent=1 // pred_fallthru
      _
    // Predicated region
    $region138: #{tpu_custom_call.1} parent=1 // pred_check
      _
    $region139: #{tpu_custom_call.1} parent=1 // pred_check_branch
      %270 = sbr.rel (0) target = $region141
    $region140: #{tpu_custom_call.1} parent=1 // pred_region
      %271 = dma.done [#allocation16], 2560
    $region141: #{tpu_custom_call.1} parent=1 // pred_fallthru
      _
    // Predicated region
    $region142: #{tpu_custom_call.1} parent=1 // pred_check
      _
    $region143: #{tpu_custom_call.1} parent=1 // pred_check_branch
      %273 = sbr.rel (0) target = $region145
    $region144: #{tpu_custom_call.1} parent=1 // pred_region
      %274 = dma.done [#allocation16], 64
    $region145: #{tpu_custom_call.1} parent=1 // pred_fallthru
      _
    // Predicated region
    $region146: #{tpu_custom_call.1} parent=1 // pred_check
      _
    $region147: #{tpu_custom_call.1} parent=1 // pred_check_branch
      %276 = sbr.rel (0) target = $region149
    $region148: #{tpu_custom_call.1} parent=1 // pred_region
      %277 = dma.done [#allocation19], 16384
    $region149: #{tpu_custom_call.1} parent=1 // pred_fallthru
      _
    // Predicated region
    $region150: #{tpu_custom_call.1} parent=1 // pred_check
      _
    $region151: #{tpu_custom_call.1} parent=1 // pred_check_branch
      %279 = sbr.rel (0) target = $region153
    $region152: #{tpu_custom_call.1} parent=1 // pred_region
      %280 = dma.done [#allocation19], 32
    $region153: #{tpu_custom_call.1} parent=1 // pred_fallthru
      _
    // Predicated region
    $region154: #{tpu_custom_call.1} parent=1 // pred_check
      _
    $region155: #{tpu_custom_call.1} parent=1 // pred_check_branch
      %282 = sbr.rel (0) target = $region157
    $region156: #{tpu_custom_call.1} parent=1 // pred_region
      %283 = dma.done [#allocation22], 16
    $region157: #{tpu_custom_call.1} parent=1 // pred_fallthru
      _
    // Predicated region
    $region158: #{tpu_custom_call.1} parent=1 // pred_check
      _
    $region159: #{tpu_custom_call.1} parent=1 // pred_check_branch
      %285 = sbr.rel (0) target = $region161
    $region160: #{tpu_custom_call.1} parent=1 // pred_region
      %286 = dma.done [#allocation22], 16
    $region161: #{tpu_custom_call.1} parent=1 // pred_fallthru
      _
    // Predicated region
    $region162: #{tpu_custom_call.1} parent=1 // pred_check
      _
    $region163: #{tpu_custom_call.1} parent=1 // pred_check_branch
      %288 = sbr.rel (0) target = $region165
    $region164: #{tpu_custom_call.1} parent=1 // pred_region
      %289 = dma.done [#allocation25], 16
    $region165: #{tpu_custom_call.1} parent=1 // pred_fallthru
      _
    %v290 = vld [vmem:[#allocation2] sm:$0xff]
    %v291 = vld [vmem:[%s51] sm:$0xff]
    %v292 = vld [vmem:[#allocation8] sm:$0xff]
    %v293 = vld [vmem:[#allocation8 + $0x8] sm:$0xff]
    %v294 = vld [vmem:[#allocation8 + $0x10] sm:$0xff]
    %v295 = vld [vmem:[#allocation8 + $0x18] sm:$0xff]
    %v296 = vld [vmem:[#allocation8 + $0x20] sm:$0xff]
    %v297 = vld [vmem:[#allocation8 + $0x28] sm:$0xff]
    %v298 = vld [vmem:[#allocation8 + $0x30] sm:$0xff]
    %v299 = vld [vmem:[#allocation8 + $0x38] sm:$0xff]
    %v300 = vld [vmem:[#allocation8 + $0x40] sm:$0xff]
    %v301 = vld [vmem:[#allocation8 + $0x48] sm:$0xff]
    %v302 = vld [vmem:[#allocation8 + $0x50] sm:$0xff]
    %v303 = vld [vmem:[#allocation8 + $0x58] sm:$0xff]
    %v304 = vld [vmem:[#allocation8 + $0x60] sm:$0xff]
    %v305 = vld [vmem:[#allocation8 + $0x68] sm:$0xff]
    %v306 = vld [vmem:[#allocation8 + $0x70] sm:$0xff]
    %v307 = vld [vmem:[#allocation8 + $0x78] sm:$0xff]
    %v308 = vld [vmem:[#allocation8 + $0x80] sm:$0xff]
    %v309 = vld [vmem:[#allocation8 + $0x88] sm:$0xff]
    %v310 = vld [vmem:[#allocation8 + $0x90] sm:$0xff]
    %v311 = vld [vmem:[#allocation8 + $0x98] sm:$0xff]
    %v312 = vld [vmem:[#allocation8 + $0xa0] sm:$0xff]
    %v313 = vld [vmem:[#allocation8 + $0xa8] sm:$0xff]
    %v314 = vld [vmem:[#allocation8 + $0xb0] sm:$0xff]
    %v315 = vld [vmem:[#allocation8 + $0xb8] sm:$0xff]
    %v316 = vld [vmem:[#allocation9] sm:$0xf]
    %v318 = vlaneseq
    %v319 = vshrl.u32 %v318, 7
    %v320 = vsub.s32 0, %v319
    %v321 = vrot.slane %v316, %v320
    %v322 = vlaneseq
    %v323 = vshrl.u32 %v322, 7
    %v324 = vsub.s32 1, %v323
    %v325 = vrot.slane %v316, %v324
    %v326 = vlaneseq
    %v327 = vshrl.u32 %v326, 7
    %v328 = vsub.s32 2, %v327
    %v329 = vrot.slane %v316, %v328
    %v330 = vlaneseq
    %v331 = vshrl.u32 %v330, 7
    %v332 = vsub.s32 3, %v331
    %v333 = vrot.slane %v316, %v332
    %vm338 = vcmask 392192
    %v340 = vsel %vm338, %v290, 0
    %342 = vmatprep.subr.mxu0 %v293
    %343 = vmatpush1.msra.mxu0 %v292
    %344 = vmatprep.subr.mxu0 %v297
    %345 = vmatpush1.msra.mxu0 %v296
    %346 = vmatprep.subr.mxu0 %v301
    %347 = vmatpush1.msra.mxu0 %v300
    %348 = vmatprep.subr.mxu0 %v305
    %349 = vmatpush1.msra.mxu0 %v304
    %350 = vmatprep.subr.mxu0 %v309
    %351 = vmatpush1.msra.mxu0 %v308
    %352 = vmatprep.subr.mxu0 %v313
    %353 = vmatpush1.msra.mxu0 %v312
    %354 = vmatprep.subr.mxu0 0.0
    %355 = vmatpush1.msra.mxu0 0.0
    %356 = vmatprep.subr.mxu0 0.0
    %357 = vmatpush1.msra.mxu0 0.0
    %358 = vmatprep.subr.mxu0 0.0
    %359 = vmatpush1.msra.mxu0 0.0
    %360 = vmatprep.subr.mxu0 0.0
    %361 = vmatpush1.msra.mxu0 0.0
    %362 = vmatprep.subr.mxu0 0.0
    %363 = vmatpush1.msra.mxu0 0.0
    %364 = vmatprep.subr.mxu0 0.0
    %365 = vmatpush1.msra.mxu0 0.0
    %366 = vmatprep.subr.mxu0 0.0
    %367 = vmatpush1.msra.mxu0 0.0
    %368 = vmatprep.subr.mxu0 0.0
    %369 = vmatpush1.msra.mxu0 0.0
    %370 = vmatprep.subr.mxu0 0.0
    %371 = vmatpush1.msra.mxu0 0.0
    %372 = vmatprep.subr.mxu0 0.0
    %373 = vmatpush1.msra.mxu0 0.0
    %374 = vmatprep.subr.mxu0 0.0
    %375 = vmatpush1.msra.mxu0 0.0
    %376 = vmatprep.subr.mxu0 0.0
    %377 = vmatpush1.msra.mxu0 0.0
    %378 = vmatprep.subr.mxu0 0.0
    %379 = vmatpush1.msra.mxu0 0.0
    %380 = vmatprep.subr.mxu0 0.0
    %381 = vmatpush1.msra.mxu0 0.0
    %382 = vmatprep.subr.mxu0 0.0
    %383 = vmatpush1.msra.mxu0 0.0
    %384 = vmatprep.subr.mxu0 0.0
    %385 = vmatpush1.msra.mxu0 0.0
    %386 = vmatprep.subr.mxu0 0.0
    %387 = vmatpush1.msra.mxu0 0.0
    %388 = vmatprep.subr.mxu0 0.0
    %389 = vmatpush1.msra.mxu0 0.0
    %390 = vmatprep.subr.mxu0 0.0
    %391 = vmatpush1.msra.mxu0 0.0
    %392 = vmatprep.subr.mxu0 0.0
    %393 = vmatpush1.msra.mxu0 0.0
    %394 = vmatprep.subr.mxu0 0.0
    %395 = vmatpush1.msra.mxu0 0.0
    %396 = vmatprep.subr.mxu0 0.0
    %397 = vmatpush1.msra.mxu0 0.0
    %398 = vmatprep.subr.mxu0 0.0
    %399 = vmatpush1.msra.mxu0 0.0
    %400 = vmatprep.subr.mxu0 0.0
    %401 = vmatpush1.msra.mxu0 0.0
    %402 = vmatprep.subr.mxu0 0.0
    %403 = vmatpush1.msra.mxu0 0.0
    %404 = vmatprep.subr.mxu0 0.0
    %405 = vmatpush1.msra.mxu0 0.0
    %406 = vmatprep.mubr.f32.mxu0 0.0
    %407 = vmatmul.mubr.f32.gmra.mrb[0].mxu0 %v340
    %v408 = vpop.f32.mrb[0].mxu0
    %v409 = vadd.f32 %v321, %v408
    %v410 = vpop.f32.mrb[0].mxu0
    %v411 = vadd.f32 %v325, %v410
    %412 = vdwg.mxu0
    %413 = vmatprep.subr.mxu0 %v295
    %414 = vmatpush1.msra.mxu0 %v294
    %415 = vmatprep.subr.mxu0 %v299
    %416 = vmatpush1.msra.mxu0 %v298
    %417 = vmatprep.subr.mxu0 %v303
    %418 = vmatpush1.msra.mxu0 %v302
    %419 = vmatprep.subr.mxu0 %v307
    %420 = vmatpush1.msra.mxu0 %v306
    %421 = vmatprep.subr.mxu0 %v311
    %422 = vmatpush1.msra.mxu0 %v310
    %423 = vmatprep.subr.mxu0 %v315
    %424 = vmatpush1.msra.mxu0 %v314
    %425 = vmatprep.subr.mxu0 0.0
    %426 = vmatpush1.msra.mxu0 0.0
    %427 = vmatprep.subr.mxu0 0.0
    %428 = vmatpush1.msra.mxu0 0.0
    %429 = vmatprep.subr.mxu0 0.0
    %430 = vmatpush1.msra.mxu0 0.0
    %431 = vmatprep.subr.mxu0 0.0
    %432 = vmatpush1.msra.mxu0 0.0
    %433 = vmatprep.subr.mxu0 0.0
    %434 = vmatpush1.msra.mxu0 0.0
    %435 = vmatprep.subr.mxu0 0.0
    %436 = vmatpush1.msra.mxu0 0.0
    %437 = vmatprep.subr.mxu0 0.0
    %438 = vmatpush1.msra.mxu0 0.0
    %439 = vmatprep.subr.mxu0 0.0
    %440 = vmatpush1.msra.mxu0 0.0
    %441 = vmatprep.subr.mxu0 0.0
    %442 = vmatpush1.msra.mxu0 0.0
    %443 = vmatprep.subr.mxu0 0.0
    %444 = vmatpush1.msra.mxu0 0.0
    %445 = vmatprep.subr.mxu0 0.0
    %446 = vmatpush1.msra.mxu0 0.0
    %447 = vmatprep.subr.mxu0 0.0
    %448 = vmatpush1.msra.mxu0 0.0
    %449 = vmatprep.subr.mxu0 0.0
    %450 = vmatpush1.msra.mxu0 0.0
    %451 = vmatprep.subr.mxu0 0.0
    %452 = vmatpush1.msra.mxu0 0.0
    %453 = vmatprep.subr.mxu0 0.0
    %454 = vmatpush1.msra.mxu0 0.0
    %455 = vmatprep.subr.mxu0 0.0
    %456 = vmatpush1.msra.mxu0 0.0
    %457 = vmatprep.subr.mxu0 0.0
    %458 = vmatpush1.msra.mxu0 0.0
    %459 = vmatprep.subr.mxu0 0.0
    %460 = vmatpush1.msra.mxu0 0.0
    %461 = vmatprep.subr.mxu0 0.0
    %462 = vmatpush1.msra.mxu0 0.0
    %463 = vmatprep.subr.mxu0 0.0
    %464 = vmatpush1.msra.mxu0 0.0
    %465 = vmatprep.subr.mxu0 0.0
    %466 = vmatpush1.msra.mxu0 0.0
    %467 = vmatprep.subr.mxu0 0.0
    %468 = vmatpush1.msra.mxu0 0.0
    %469 = vmatprep.subr.mxu0 0.0
    %470 = vmatpush1.msra.mxu0 0.0
    %471 = vmatprep.subr.mxu0 0.0
    %472 = vmatpush1.msra.mxu0 0.0
    %473 = vmatprep.subr.mxu0 0.0
    %474 = vmatpush1.msra.mxu0 0.0
    %475 = vmatprep.subr.mxu0 0.0
    %476 = vmatpush1.msra.mxu0 0.0
    %477 = vmatprep.mubr.f32.mxu0 0.0
    %478 = vmatmul.mubr.f32.gmra.mrb[0].mxu0 %v340
    %v479 = vpop.f32.mrb[0].mxu0
    %v480 = vadd.f32 %v329, %v479
    %v481 = vpop.f32.mrb[0].mxu0
    %v482 = vadd.f32 %v333, %v481
    %483 = vdwg.mxu0
    %v484 = vmax.f32 %v409, 0.0
    %v485 = vmax.f32 %v411, 0.0
    %v486 = vmax.f32 %v480, 0.0
    %v487 = vmax.f32 %v482, 0.0
    %v488 = vld [vmem:[%s15] sm:$0xff]
    %v489 = vld [vmem:[%s15 + $0x8] sm:$0xff]
    %v490 = vld [vmem:[%s15 + $0x10] sm:$0xff]
    %v491 = vld [vmem:[%s15 + $0x18] sm:$0xff]
    %v492 = vld [vmem:[%s15 + $0x20] sm:$0xff]
    %v493 = vld [vmem:[%s15 + $0x28] sm:$0xff]
    %v494 = vld [vmem:[%s15 + $0x30] sm:$0xff]
    %v495 = vld [vmem:[%s15 + $0x38] sm:$0xff]
    %v496 = vld [vmem:[%s15 + $0x40] sm:$0xff]
    %v497 = vld [vmem:[%s15 + $0x48] sm:$0xff]
    %v498 = vld [vmem:[%s15 + $0x50] sm:$0xff]
    %v499 = vld [vmem:[%s15 + $0x58] sm:$0xff]
    %v500 = vld [vmem:[%s15 + $0x60] sm:$0xff]
    %v501 = vld [vmem:[%s15 + $0x68] sm:$0xff]
    %v502 = vld [vmem:[%s15 + $0x70] sm:$0xff]
    %v503 = vld [vmem:[%s15 + $0x78] sm:$0xff]
    %v504 = vld [vmem:[%s15 + $0x80] sm:$0xff]
    %v505 = vld [vmem:[%s15 + $0x88] sm:$0xff]
    %v506 = vld [vmem:[%s15 + $0x90] sm:$0xff]
    %v507 = vld [vmem:[%s15 + $0x98] sm:$0xff]
    %v508 = vld [vmem:[%s15 + $0xa0] sm:$0xff]
    %v509 = vld [vmem:[%s15 + $0xa8] sm:$0xff]
    %v510 = vld [vmem:[%s15 + $0xb0] sm:$0xff]
    %v511 = vld [vmem:[%s15 + $0xb8] sm:$0xff]
    %v512 = vld [vmem:[%s15 + $0xc0] sm:$0xff]
    %v513 = vld [vmem:[%s15 + $0xc8] sm:$0xff]
    %v514 = vld [vmem:[%s15 + $0xd0] sm:$0xff]
    %v515 = vld [vmem:[%s15 + $0xd8] sm:$0xff]
    %v516 = vld [vmem:[%s15 + $0xe0] sm:$0xff]
    %v517 = vld [vmem:[%s15 + $0xe8] sm:$0xff]
    %v518 = vld [vmem:[%s15 + $0xf0] sm:$0xff]
    %v519 = vld [vmem:[%s15 + $0xf8] sm:$0xff]
    %v520 = vld [vmem:[%s15 + $0x100] sm:$0xff]
    %v521 = vld [vmem:[%s15 + $0x108] sm:$0xff]
    %v522 = vld [vmem:[%s15 + $0x110] sm:$0xff]
    %v523 = vld [vmem:[%s15 + $0x118] sm:$0xff]
    %v524 = vld [vmem:[%s15 + $0x120] sm:$0xff]
    %v525 = vld [vmem:[%s15 + $0x128] sm:$0xff]
    %v526 = vld [vmem:[%s15 + $0x130] sm:$0xff]
    %v527 = vld [vmem:[%s15 + $0x138] sm:$0xff]
    %v528 = vld [vmem:[%s15 + $0x140] sm:$0xff]
    %v529 = vld [vmem:[%s15 + $0x148] sm:$0xff]
    %v530 = vld [vmem:[%s15 + $0x150] sm:$0xff]
    %v531 = vld [vmem:[%s15 + $0x158] sm:$0xff]
    %v532 = vld [vmem:[%s15 + $0x160] sm:$0xff]
    %v533 = vld [vmem:[%s15 + $0x168] sm:$0xff]
    %v534 = vld [vmem:[%s15 + $0x170] sm:$0xff]
    %v535 = vld [vmem:[%s15 + $0x178] sm:$0xff]
    %v536 = vld [vmem:[%s15 + $0x180] sm:$0xff]
    %v537 = vld [vmem:[%s15 + $0x188] sm:$0xff]
    %v538 = vld [vmem:[%s15 + $0x190] sm:$0xff]
    %v539 = vld [vmem:[%s15 + $0x198] sm:$0xff]
    %v540 = vld [vmem:[%s15 + $0x1a0] sm:$0xff]
    %v541 = vld [vmem:[%s15 + $0x1a8] sm:$0xff]
    %v542 = vld [vmem:[%s15 + $0x1b0] sm:$0xff]
    %v543 = vld [vmem:[%s15 + $0x1b8] sm:$0xff]
    %v544 = vld [vmem:[%s15 + $0x1c0] sm:$0xff]
    %v545 = vld [vmem:[%s15 + $0x1c8] sm:$0xff]
    %v546 = vld [vmem:[%s15 + $0x1d0] sm:$0xff]
    %v547 = vld [vmem:[%s15 + $0x1d8] sm:$0xff]
    %v548 = vld [vmem:[%s15 + $0x1e0] sm:$0xff]
    %v549 = vld [vmem:[%s15 + $0x1e8] sm:$0xff]
    %v550 = vld [vmem:[%s15 + $0x1f0] sm:$0xff]
    %v551 = vld [vmem:[%s15 + $0x1f8] sm:$0xff]
    %v552 = vld [vmem:[%s15 + $0x200] sm:$0xff]
    %v553 = vld [vmem:[%s15 + $0x208] sm:$0xff]
    %v554 = vld [vmem:[%s15 + $0x210] sm:$0xff]
    %v555 = vld [vmem:[%s15 + $0x218] sm:$0xff]
    %v556 = vld [vmem:[%s15 + $0x220] sm:$0xff]
    %v557 = vld [vmem:[%s15 + $0x228] sm:$0xff]
    %v558 = vld [vmem:[%s15 + $0x230] sm:$0xff]
    %v559 = vld [vmem:[%s15 + $0x238] sm:$0xff]
    %v560 = vld [vmem:[%s15 + $0x240] sm:$0xff]
    %v561 = vld [vmem:[%s15 + $0x248] sm:$0xff]
    %v562 = vld [vmem:[%s15 + $0x250] sm:$0xff]
    %v563 = vld [vmem:[%s15 + $0x258] sm:$0xff]
    %v564 = vld [vmem:[%s15 + $0x260] sm:$0xff]
    %v565 = vld [vmem:[%s15 + $0x268] sm:$0xff]
    %v566 = vld [vmem:[%s15 + $0x270] sm:$0xff]
    %v567 = vld [vmem:[%s15 + $0x278] sm:$0xff]
    %v568 = vld [vmem:[%s15 + $0x280] sm:$0xff]
    %v569 = vld [vmem:[%s15 + $0x288] sm:$0xff]
    %v570 = vld [vmem:[%s15 + $0x290] sm:$0xff]
    %v571 = vld [vmem:[%s15 + $0x298] sm:$0xff]
    %v572 = vld [vmem:[%s15 + $0x2a0] sm:$0xff]
    %v573 = vld [vmem:[%s15 + $0x2a8] sm:$0xff]
    %v574 = vld [vmem:[%s15 + $0x2b0] sm:$0xff]
    %v575 = vld [vmem:[%s15 + $0x2b8] sm:$0xff]
    %v576 = vld [vmem:[%s15 + $0x2c0] sm:$0xff]
    %v577 = vld [vmem:[%s15 + $0x2c8] sm:$0xff]
    %v578 = vld [vmem:[%s15 + $0x2d0] sm:$0xff]
    %v579 = vld [vmem:[%s15 + $0x2d8] sm:$0xff]
    %v580 = vld [vmem:[%s15 + $0x2e0] sm:$0xff]
    %v581 = vld [vmem:[%s15 + $0x2e8] sm:$0xff]
    %v582 = vld [vmem:[%s15 + $0x2f0] sm:$0xff]
    %v583 = vld [vmem:[%s15 + $0x2f8] sm:$0xff]
    %v584 = vld [vmem:[%s15 + $0x300] sm:$0xff]
    %v585 = vld [vmem:[%s15 + $0x308] sm:$0xff]
    %v586 = vld [vmem:[%s15 + $0x310] sm:$0xff]
    %v587 = vld [vmem:[%s15 + $0x318] sm:$0xff]
    %v588 = vld [vmem:[%s15 + $0x320] sm:$0xff]
    %v589 = vld [vmem:[%s15 + $0x328] sm:$0xff]
    %v590 = vld [vmem:[%s15 + $0x330] sm:$0xff]
    %v591 = vld [vmem:[%s15 + $0x338] sm:$0xff]
    %v592 = vld [vmem:[%s15 + $0x340] sm:$0xff]
    %v593 = vld [vmem:[%s15 + $0x348] sm:$0xff]
    %v594 = vld [vmem:[%s15 + $0x350] sm:$0xff]
    %v595 = vld [vmem:[%s15 + $0x358] sm:$0xff]
    %v596 = vld [vmem:[%s15 + $0x360] sm:$0xff]
    %v597 = vld [vmem:[%s15 + $0x368] sm:$0xff]
    %v598 = vld [vmem:[%s15 + $0x370] sm:$0xff]
    %v599 = vld [vmem:[%s15 + $0x378] sm:$0xff]
    %v600 = vld [vmem:[%s15 + $0x380] sm:$0xff]
    %v601 = vld [vmem:[%s15 + $0x388] sm:$0xff]
    %v602 = vld [vmem:[%s15 + $0x390] sm:$0xff]
    %v603 = vld [vmem:[%s15 + $0x398] sm:$0xff]
    %v604 = vld [vmem:[%s15 + $0x3a0] sm:$0xff]
    %v605 = vld [vmem:[%s15 + $0x3a8] sm:$0xff]
    %v606 = vld [vmem:[%s15 + $0x3b0] sm:$0xff]
    %v607 = vld [vmem:[%s15 + $0x3b8] sm:$0xff]
    %v608 = vld [vmem:[%s15 + $0x3c0] sm:$0xff]
    %v609 = vld [vmem:[%s15 + $0x3c8] sm:$0xff]
    %v610 = vld [vmem:[%s15 + $0x3d0] sm:$0xff]
    %v611 = vld [vmem:[%s15 + $0x3d8] sm:$0xff]
    %v612 = vld [vmem:[%s15 + $0x3e0] sm:$0xff]
    %v613 = vld [vmem:[%s15 + $0x3e8] sm:$0xff]
    %v614 = vld [vmem:[%s15 + $0x3f0] sm:$0xff]
    %v615 = vld [vmem:[%s15 + $0x3f8] sm:$0xff]
    %v616 = vld [vmem:[%s17] sm:$0x3]
    %v618 = vlaneseq
    %v619 = vshrl.u32 %v618, 7
    %v620 = vsub.s32 0, %v619
    %v621 = vrot.slane %v616, %v620
    %v622 = vlaneseq
    %v623 = vshrl.u32 %v622, 7
    %v624 = vsub.s32 1, %v623
    %v625 = vrot.slane %v616, %v624
    %628 = vmatprep.subr.mxu0 %v489
    %629 = vmatpush1.msra.mxu0 %v488
    %630 = vmatprep.subr.mxu0 %v491
    %631 = vmatpush1.msra.mxu0 %v490
    %632 = vmatprep.subr.mxu0 %v493
    %633 = vmatpush1.msra.mxu0 %v492
    %634 = vmatprep.subr.mxu0 %v495
    %635 = vmatpush1.msra.mxu0 %v494
    %636 = vmatprep.subr.mxu0 %v497
    %637 = vmatpush1.msra.mxu0 %v496
    %638 = vmatprep.subr.mxu0 %v499
    %639 = vmatpush1.msra.mxu0 %v498
    %640 = vmatprep.subr.mxu0 %v501
    %641 = vmatpush1.msra.mxu0 %v500
    %642 = vmatprep.subr.mxu0 %v503
    %643 = vmatpush1.msra.mxu0 %v502
    %644 = vmatprep.subr.mxu0 %v505
    %645 = vmatpush1.msra.mxu0 %v504
    %646 = vmatprep.subr.mxu0 %v507
    %647 = vmatpush1.msra.mxu0 %v506
    %648 = vmatprep.subr.mxu0 %v509
    %649 = vmatpush1.msra.mxu0 %v508
    %650 = vmatprep.subr.mxu0 %v511
    %651 = vmatpush1.msra.mxu0 %v510
    %652 = vmatprep.subr.mxu0 %v513
    %653 = vmatpush1.msra.mxu0 %v512
    %654 = vmatprep.subr.mxu0 %v515
    %655 = vmatpush1.msra.mxu0 %v514
    %656 = vmatprep.subr.mxu0 %v517
    %657 = vmatpush1.msra.mxu0 %v516
    %658 = vmatprep.subr.mxu0 %v519
    %659 = vmatpush1.msra.mxu0 %v518
    %660 = vmatprep.subr.mxu0 %v521
    %661 = vmatpush1.msra.mxu0 %v520
    %662 = vmatprep.subr.mxu0 %v523
    %663 = vmatpush1.msra.mxu0 %v522
    %664 = vmatprep.subr.mxu0 %v525
    %665 = vmatpush1.msra.mxu0 %v524
    %666 = vmatprep.subr.mxu0 %v527
    %667 = vmatpush1.msra.mxu0 %v526
    %668 = vmatprep.subr.mxu0 %v529
    %669 = vmatpush1.msra.mxu0 %v528
    %670 = vmatprep.subr.mxu0 %v531
    %671 = vmatpush1.msra.mxu0 %v530
    %672 = vmatprep.subr.mxu0 %v533
    %673 = vmatpush1.msra.mxu0 %v532
    %674 = vmatprep.subr.mxu0 %v535
    %675 = vmatpush1.msra.mxu0 %v534
    %676 = vmatprep.subr.mxu0 %v537
    %677 = vmatpush1.msra.mxu0 %v536
    %678 = vmatprep.subr.mxu0 %v539
    %679 = vmatpush1.msra.mxu0 %v538
    %680 = vmatprep.subr.mxu0 %v541
    %681 = vmatpush1.msra.mxu0 %v540
    %682 = vmatprep.subr.mxu0 %v543
    %683 = vmatpush1.msra.mxu0 %v542
    %684 = vmatprep.subr.mxu0 %v545
    %685 = vmatpush1.msra.mxu0 %v544
    %686 = vmatprep.subr.mxu0 %v547
    %687 = vmatpush1.msra.mxu0 %v546
    %688 = vmatprep.subr.mxu0 %v549
    %689 = vmatpush1.msra.mxu0 %v548
    %690 = vmatprep.subr.mxu0 %v551
    %691 = vmatpush1.msra.mxu0 %v550
    %692 = vmatprep.mubr.f32.mxu0 %v485
    %693 = vmatmul.mubr.f32.gmra.mrb[0].mxu0 %v484
    %v694 = vpop.f32.mrb[0].mxu0
    %v695 = vadd.f32 %v621, %v694
    %v696 = vpop.f32.mrb[0].mxu0
    %v697 = vadd.f32 %v625, %v696
    %698 = vdwg.mxu0
    %699 = vmatprep.subr.mxu0 %v553
    %700 = vmatpush1.msra.mxu0 %v552
    %701 = vmatprep.subr.mxu0 %v555
    %702 = vmatpush1.msra.mxu0 %v554
    %703 = vmatprep.subr.mxu0 %v557
    %704 = vmatpush1.msra.mxu0 %v556
    %705 = vmatprep.subr.mxu0 %v559
    %706 = vmatpush1.msra.mxu0 %v558
    %707 = vmatprep.subr.mxu0 %v561
    %708 = vmatpush1.msra.mxu0 %v560
    %709 = vmatprep.subr.mxu0 %v563
    %710 = vmatpush1.msra.mxu0 %v562
    %711 = vmatprep.subr.mxu0 %v565
    %712 = vmatpush1.msra.mxu0 %v564
    %713 = vmatprep.subr.mxu0 %v567
    %714 = vmatpush1.msra.mxu0 %v566
    %715 = vmatprep.subr.mxu0 %v569
    %716 = vmatpush1.msra.mxu0 %v568
    %717 = vmatprep.subr.mxu0 %v571
    %718 = vmatpush1.msra.mxu0 %v570
    %719 = vmatprep.subr.mxu0 %v573
    %720 = vmatpush1.msra.mxu0 %v572
    %721 = vmatprep.subr.mxu0 %v575
    %722 = vmatpush1.msra.mxu0 %v574
    %723 = vmatprep.subr.mxu0 %v577
    %724 = vmatpush1.msra.mxu0 %v576
    %725 = vmatprep.subr.mxu0 %v579
    %726 = vmatpush1.msra.mxu0 %v578
    %727 = vmatprep.subr.mxu0 %v581
    %728 = vmatpush1.msra.mxu0 %v580
    %729 = vmatprep.subr.mxu0 %v583
    %730 = vmatpush1.msra.mxu0 %v582
    %731 = vmatprep.subr.mxu0 %v585
    %732 = vmatpush1.msra.mxu0 %v584
    %733 = vmatprep.subr.mxu0 %v587
    %734 = vmatpush1.msra.mxu0 %v586
    %735 = vmatprep.subr.mxu0 %v589
    %736 = vmatpush1.msra.mxu0 %v588
    %737 = vmatprep.subr.mxu0 %v591
    %738 = vmatpush1.msra.mxu0 %v590
    %739 = vmatprep.subr.mxu0 %v593
    %740 = vmatpush1.msra.mxu0 %v592
    %741 = vmatprep.subr.mxu0 %v595
    %742 = vmatpush1.msra.mxu0 %v594
    %743 = vmatprep.subr.mxu0 %v597
    %744 = vmatpush1.msra.mxu0 %v596
    %745 = vmatprep.subr.mxu0 %v599
    %746 = vmatpush1.msra.mxu0 %v598
    %747 = vmatprep.subr.mxu0 %v601
    %748 = vmatpush1.msra.mxu0 %v600
    %749 = vmatprep.subr.mxu0 %v603
    %750 = vmatpush1.msra.mxu0 %v602
    %751 = vmatprep.subr.mxu0 %v605
    %752 = vmatpush1.msra.mxu0 %v604
    %753 = vmatprep.subr.mxu0 %v607
    %754 = vmatpush1.msra.mxu0 %v606
    %755 = vmatprep.subr.mxu0 %v609
    %756 = vmatpush1.msra.mxu0 %v608
    %757 = vmatprep.subr.mxu0 %v611
    %758 = vmatpush1.msra.mxu0 %v610
    %759 = vmatprep.subr.mxu0 %v613
    %760 = vmatpush1.msra.mxu0 %v612
    %761 = vmatprep.subr.mxu0 %v615
    %762 = vmatpush1.msra.mxu0 %v614
    %763 = vmatprep.mubr.f32.mxu0 %v487
    %764 = vmatmul.mubr.f32.gmra.mrb[0].mxu0 %v486
    %v765 = vpop.f32.mrb[0].mxu0
    %v766 = vadd.f32 %v695, %v765
    %v767 = vpop.f32.mrb[0].mxu0
    %v768 = vadd.f32 %v697, %v767
    %769 = vdwg.mxu0
    %v770 = vmax.f32 %v766, 0.0
    %v771 = vmax.f32 %v768, 0.0
    %v772 = vld [vmem:[%s19] sm:$0xff]
    %v773 = vld [vmem:[%s19 + $0x8] sm:$0xff]
    %v774 = vld [vmem:[%s19 + $0x10] sm:$0xff]
    %v775 = vld [vmem:[%s19 + $0x18] sm:$0xff]
    %v776 = vld [vmem:[%s19 + $0x20] sm:$0xff]
    %v777 = vld [vmem:[%s19 + $0x28] sm:$0xff]
    %v778 = vld [vmem:[%s19 + $0x30] sm:$0xff]
    %v779 = vld [vmem:[%s19 + $0x38] sm:$0xff]
    %v780 = vld [vmem:[%s19 + $0x40] sm:$0xff]
    %v781 = vld [vmem:[%s19 + $0x48] sm:$0xff]
    %v782 = vld [vmem:[%s19 + $0x50] sm:$0xff]
    %v783 = vld [vmem:[%s19 + $0x58] sm:$0xff]
    %v784 = vld [vmem:[%s19 + $0x60] sm:$0xff]
    %v785 = vld [vmem:[%s19 + $0x68] sm:$0xff]
    %v786 = vld [vmem:[%s19 + $0x70] sm:$0xff]
    %v787 = vld [vmem:[%s19 + $0x78] sm:$0xff]
    %v788 = vld [vmem:[%s19 + $0x80] sm:$0xff]
    %v789 = vld [vmem:[%s19 + $0x88] sm:$0xff]
    %v790 = vld [vmem:[%s19 + $0x90] sm:$0xff]
    %v791 = vld [vmem:[%s19 + $0x98] sm:$0xff]
    %v792 = vld [vmem:[%s19 + $0xa0] sm:$0xff]
    %v793 = vld [vmem:[%s19 + $0xa8] sm:$0xff]
    %v794 = vld [vmem:[%s19 + $0xb0] sm:$0xff]
    %v795 = vld [vmem:[%s19 + $0xb8] sm:$0xff]
    %v796 = vld [vmem:[%s19 + $0xc0] sm:$0xff]
    %v797 = vld [vmem:[%s19 + $0xc8] sm:$0xff]
    %v798 = vld [vmem:[%s19 + $0xd0] sm:$0xff]
    %v799 = vld [vmem:[%s19 + $0xd8] sm:$0xff]
    %v800 = vld [vmem:[%s19 + $0xe0] sm:$0xff]
    %v801 = vld [vmem:[%s19 + $0xe8] sm:$0xff]
    %v802 = vld [vmem:[%s19 + $0xf0] sm:$0xff]
    %v803 = vld [vmem:[%s19 + $0xf8] sm:$0xff]
    %v804 = vld [vmem:[#allocation11] sm:$0x1]
    %v806 = vlaneseq
    %v807 = vshrl.u32 %v806, 7
    %v808 = vsub.s32 0, %v807
    %v809 = vrot.slane %v804, %v808
    %811 = vmatprep.subr.mxu0 0.0
    %812 = vmatpush1.msra.mxu0 %v772
    %813 = vmatprep.subr.mxu0 0.0
    %814 = vmatpush1.msra.mxu0 %v773
    %815 = vmatprep.subr.mxu0 0.0
    %816 = vmatpush1.msra.mxu0 %v774
    %817 = vmatprep.subr.mxu0 0.0
    %818 = vmatpush1.msra.mxu0 %v775
    %819 = vmatprep.subr.mxu0 0.0
    %820 = vmatpush1.msra.mxu0 %v776
    %821 = vmatprep.subr.mxu0 0.0
    %822 = vmatpush1.msra.mxu0 %v777
    %823 = vmatprep.subr.mxu0 0.0
    %824 = vmatpush1.msra.mxu0 %v778
    %825 = vmatprep.subr.mxu0 0.0
    %826 = vmatpush1.msra.mxu0 %v779
    %827 = vmatprep.subr.mxu0 0.0
    %828 = vmatpush1.msra.mxu0 %v780
    %829 = vmatprep.subr.mxu0 0.0
    %830 = vmatpush1.msra.mxu0 %v781
    %831 = vmatprep.subr.mxu0 0.0
    %832 = vmatpush1.msra.mxu0 %v782
    %833 = vmatprep.subr.mxu0 0.0
    %834 = vmatpush1.msra.mxu0 %v783
    %835 = vmatprep.subr.mxu0 0.0
    %836 = vmatpush1.msra.mxu0 %v784
    %837 = vmatprep.subr.mxu0 0.0
    %838 = vmatpush1.msra.mxu0 %v785
    %839 = vmatprep.subr.mxu0 0.0
    %840 = vmatpush1.msra.mxu0 %v786
    %841 = vmatprep.subr.mxu0 0.0
    %842 = vmatpush1.msra.mxu0 %v787
    %843 = vmatprep.subr.mxu0 0.0
    %844 = vmatpush1.msra.mxu0 %v788
    %845 = vmatprep.subr.mxu0 0.0
    %846 = vmatpush1.msra.mxu0 %v789
    %847 = vmatprep.subr.mxu0 0.0
    %848 = vmatpush1.msra.mxu0 %v790
    %849 = vmatprep.subr.mxu0 0.0
    %850 = vmatpush1.msra.mxu0 %v791
    %851 = vmatprep.subr.mxu0 0.0
    %852 = vmatpush1.msra.mxu0 %v792
    %853 = vmatprep.subr.mxu0 0.0
    %854 = vmatpush1.msra.mxu0 %v793
    %855 = vmatprep.subr.mxu0 0.0
    %856 = vmatpush1.msra.mxu0 %v794
    %857 = vmatprep.subr.mxu0 0.0
    %858 = vmatpush1.msra.mxu0 %v795
    %859 = vmatprep.subr.mxu0 0.0
    %860 = vmatpush1.msra.mxu0 %v796
    %861 = vmatprep.subr.mxu0 0.0
    %862 = vmatpush1.msra.mxu0 %v797
    %863 = vmatprep.subr.mxu0 0.0
    %864 = vmatpush1.msra.mxu0 %v798
    %865 = vmatprep.subr.mxu0 0.0
    %866 = vmatpush1.msra.mxu0 %v799
    %867 = vmatprep.subr.mxu0 0.0
    %868 = vmatpush1.msra.mxu0 %v800
    %869 = vmatprep.subr.mxu0 0.0
    %870 = vmatpush1.msra.mxu0 %v801
    %871 = vmatprep.subr.mxu0 0.0
    %872 = vmatpush1.msra.mxu0 %v802
    %873 = vmatprep.subr.mxu0 0.0
    %874 = vmatpush1.msra.mxu0 %v803
    %875 = vmatprep.mubr.f32.mxu0 %v771
    %876 = vmatmul.mubr.f32.gmra.mrb[0].mxu0 %v770
    %v877 = vpop.f32.mrb[0].mxu0
    %v878 = vadd.f32 %v809, %v877
    %v879 = vpop.f32.mrb[0].mxu0
    %880 = vdwg.mxu0
    %v881 = vmax.f32 %v878, 0.0
    %v882 = vld [vmem:[%s23] sm:$0xff]
    %v883 = vld [vmem:[%s23 + $0x8] sm:$0xff]
    %v884 = vld [vmem:[%s23 + $0x10] sm:$0xff]
    %v885 = vld [vmem:[%s23 + $0x18] sm:$0xff]
    %v886 = vld [vmem:[%s23 + $0x20] sm:$0xff]
    %v887 = vld [vmem:[%s23 + $0x28] sm:$0xff]
    %v888 = vld [vmem:[%s23 + $0x30] sm:$0xff]
    %v889 = vld [vmem:[%s23 + $0x38] sm:$0xff]
    %v890 = vld [vmem:[#allocation12] sm:$0x1]
    %v892 = vlaneseq
    %v893 = vshrl.u32 %v892, 7
    %v894 = vsub.s32 0, %v893
    %v895 = vrot.slane %v890, %v894
    %vm897 = vcmask 523264
    %v899 = vsel %vm897, %v881, 0
    %901 = vmatprep.subr.mxu0 0.0
    %902 = vmatpush1.msra.mxu0 %v882
    %903 = vmatprep.subr.mxu0 0.0
    %904 = vmatpush1.msra.mxu0 %v883
    %905 = vmatprep.subr.mxu0 0.0
    %906 = vmatpush1.msra.mxu0 %v884
    %907 = vmatprep.subr.mxu0 0.0
    %908 = vmatpush1.msra.mxu0 %v885
    %909 = vmatprep.subr.mxu0 0.0
    %910 = vmatpush1.msra.mxu0 %v886
    %911 = vmatprep.subr.mxu0 0.0
    %912 = vmatpush1.msra.mxu0 %v887
    %913 = vmatprep.subr.mxu0 0.0
    %914 = vmatpush1.msra.mxu0 %v888
    %915 = vmatprep.subr.mxu0 0.0
    %916 = vmatpush1.msra.mxu0 %v889
    %917 = vmatprep.subr.mxu0 0.0
    %918 = vmatpush1.msra.mxu0 0.0
    %919 = vmatprep.subr.mxu0 0.0
    %920 = vmatpush1.msra.mxu0 0.0
    %921 = vmatprep.subr.mxu0 0.0
    %922 = vmatpush1.msra.mxu0 0.0
    %923 = vmatprep.subr.mxu0 0.0
    %924 = vmatpush1.msra.mxu0 0.0
    %925 = vmatprep.subr.mxu0 0.0
    %926 = vmatpush1.msra.mxu0 0.0
    %927 = vmatprep.subr.mxu0 0.0
    %928 = vmatpush1.msra.mxu0 0.0
    %929 = vmatprep.subr.mxu0 0.0
    %930 = vmatpush1.msra.mxu0 0.0
    %931 = vmatprep.subr.mxu0 0.0
    %932 = vmatpush1.msra.mxu0 0.0
    %933 = vmatprep.subr.mxu0 0.0
    %934 = vmatpush1.msra.mxu0 0.0
    %935 = vmatprep.subr.mxu0 0.0
    %936 = vmatpush1.msra.mxu0 0.0
    %937 = vmatprep.subr.mxu0 0.0
    %938 = vmatpush1.msra.mxu0 0.0
    %939 = vmatprep.subr.mxu0 0.0
    %940 = vmatpush1.msra.mxu0 0.0
    %941 = vmatprep.subr.mxu0 0.0
    %942 = vmatpush1.msra.mxu0 0.0
    %943 = vmatprep.subr.mxu0 0.0
    %944 = vmatpush1.msra.mxu0 0.0
    %945 = vmatprep.subr.mxu0 0.0
    %946 = vmatpush1.msra.mxu0 0.0
    %947 = vmatprep.subr.mxu0 0.0
    %948 = vmatpush1.msra.mxu0 0.0
    %949 = vmatprep.subr.mxu0 0.0
    %950 = vmatpush1.msra.mxu0 0.0
    %951 = vmatprep.subr.mxu0 0.0
    %952 = vmatpush1.msra.mxu0 0.0
    %953 = vmatprep.subr.mxu0 0.0
    %954 = vmatpush1.msra.mxu0 0.0
    %955 = vmatprep.subr.mxu0 0.0
    %956 = vmatpush1.msra.mxu0 0.0
    %957 = vmatprep.subr.mxu0 0.0
    %958 = vmatpush1.msra.mxu0 0.0
    %959 = vmatprep.subr.mxu0 0.0
    %960 = vmatpush1.msra.mxu0 0.0
    %961 = vmatprep.subr.mxu0 0.0
    %962 = vmatpush1.msra.mxu0 0.0
    %963 = vmatprep.subr.mxu0 0.0
    %964 = vmatpush1.msra.mxu0 0.0
    %965 = vmatprep.mubr.f32.mxu0 0.0
    %966 = vmatmul.mubr.f32.gmra.mrb[0].mxu0 %v899
    %v967 = vpop.f32.mrb[0].mxu0
    %v968 = vadd.f32 %v895, %v967
    %v969 = vpop.f32.mrb[0].mxu0
    %970 = vdwg.mxu0
    %v971 = vld [vmem:[%s27] sm:$0xff]
    %v972 = vld [vmem:[%s27 + $0x8] sm:$0xff]
    %v973 = vld [vmem:[%s27 + $0x10] sm:$0xff]
    %v974 = vld [vmem:[%s27 + $0x18] sm:$0xff]
    %v975 = vld [vmem:[%s27 + $0x20] sm:$0xff]
    %v976 = vld [vmem:[%s27 + $0x28] sm:$0xff]
    %v977 = vld [vmem:[%s27 + $0x30] sm:$0xff]
    %v978 = vld [vmem:[%s27 + $0x38] sm:$0xff]
    %v979 = vld [vmem:[#allocation14] sm:$0x1]
    %v981 = vlaneseq
    %v982 = vshrl.u32 %v981, 7
    %v983 = vsub.s32 0, %v982
    %v984 = vrot.slane %v979, %v983
    %986 = vmatprep.subr.mxu0 0.0
    %987 = vmatpush1.msra.mxu0 %v971
    %988 = vmatprep.subr.mxu0 0.0
    %989 = vmatpush1.msra.mxu0 %v972
    %990 = vmatprep.subr.mxu0 0.0
    %991 = vmatpush1.msra.mxu0 %v973
    %992 = vmatprep.subr.mxu0 0.0
    %993 = vmatpush1.msra.mxu0 %v974
    %994 = vmatprep.subr.mxu0 0.0
    %995 = vmatpush1.msra.mxu0 %v975
    %996 = vmatprep.subr.mxu0 0.0
    %997 = vmatpush1.msra.mxu0 %v976
    %998 = vmatprep.subr.mxu0 0.0
    %999 = vmatpush1.msra.mxu0 %v977
    %1000 = vmatprep.subr.mxu0 0.0
    %1001 = vmatpush1.msra.mxu0 %v978
    %1002 = vmatprep.subr.mxu0 0.0
    %1003 = vmatpush1.msra.mxu0 0.0
    %1004 = vmatprep.subr.mxu0 0.0
    %1005 = vmatpush1.msra.mxu0 0.0
    %1006 = vmatprep.subr.mxu0 0.0
    %1007 = vmatpush1.msra.mxu0 0.0
    %1008 = vmatprep.subr.mxu0 0.0
    %1009 = vmatpush1.msra.mxu0 0.0
    %1010 = vmatprep.subr.mxu0 0.0
    %1011 = vmatpush1.msra.mxu0 0.0
    %1012 = vmatprep.subr.mxu0 0.0
    %1013 = vmatpush1.msra.mxu0 0.0
    %1014 = vmatprep.subr.mxu0 0.0
    %1015 = vmatpush1.msra.mxu0 0.0
    %1016 = vmatprep.subr.mxu0 0.0
    %1017 = vmatpush1.msra.mxu0 0.0
    %1018 = vmatprep.subr.mxu0 0.0
    %1019 = vmatpush1.msra.mxu0 0.0
    %1020 = vmatprep.subr.mxu0 0.0
    %1021 = vmatpush1.msra.mxu0 0.0
    %1022 = vmatprep.subr.mxu0 0.0
    %1023 = vmatpush1.msra.mxu0 0.0
    %1024 = vmatprep.subr.mxu0 0.0
    %1025 = vmatpush1.msra.mxu0 0.0
    %1026 = vmatprep.subr.mxu0 0.0
    %1027 = vmatpush1.msra.mxu0 0.0
    %1028 = vmatprep.subr.mxu0 0.0
    %1029 = vmatpush1.msra.mxu0 0.0
    %1030 = vmatprep.subr.mxu0 0.0
    %1031 = vmatpush1.msra.mxu0 0.0
    %1032 = vmatprep.subr.mxu0 0.0
    %1033 = vmatpush1.msra.mxu0 0.0
    %1034 = vmatprep.subr.mxu0 0.0
    %1035 = vmatpush1.msra.mxu0 0.0
    %1036 = vmatprep.subr.mxu0 0.0
    %1037 = vmatpush1.msra.mxu0 0.0
    %1038 = vmatprep.subr.mxu0 0.0
    %1039 = vmatpush1.msra.mxu0 0.0
    %1040 = vmatprep.subr.mxu0 0.0
    %1041 = vmatpush1.msra.mxu0 0.0
    %1042 = vmatprep.subr.mxu0 0.0
    %1043 = vmatpush1.msra.mxu0 0.0
    %1044 = vmatprep.subr.mxu0 0.0
    %1045 = vmatpush1.msra.mxu0 0.0
    %1046 = vmatprep.subr.mxu0 0.0
    %1047 = vmatpush1.msra.mxu0 0.0
    %1048 = vmatprep.subr.mxu0 0.0
    %1049 = vmatpush1.msra.mxu0 0.0
    %1050 = vmatprep.mubr.f32.mxu0 0.0
    %1051 = vmatmul.mubr.f32.gmra.mrb[0].mxu0 %v899
    %v1052 = vpop.f32.mrb[0].mxu0
    %v1053 = vadd.f32 %v984, %v1052
    %v1054 = vpop.f32.mrb[0].mxu0
    %1055 = vdwg.mxu0
    %v1056 = vmul.f32 %v1053, 0.5
    %v1057 = vmul.f32 %v1056, 1.442695
    %v1058 = vpow.pop %v1057
    %v1059 = vmul.f32 %v291, %v1058
    %v1060 = vadd.f32 %v968, %v1059
    %v1061 = vld [vmem:[#allocation6] sm:$0x3f]
    %v1062 = vld [vmem:[%s53] sm:$0x3f]
    %v1063 = vld [vmem:[#allocation15] sm:$0xff]
    %v1064 = vld [vmem:[#allocation15 + $0x8] sm:$0xff]
    %v1065 = vld [vmem:[#allocation15 + $0x10] sm:$0xff]
    %v1066 = vld [vmem:[#allocation15 + $0x18] sm:$0xff]
    %v1067 = vld [vmem:[#allocation15 + $0x20] sm:$0xff]
    %v1068 = vld [vmem:[#allocation15 + $0x28] sm:$0xff]
    %v1069 = vld [vmem:[#allocation15 + $0x30] sm:$0xff]
    %v1070 = vld [vmem:[#allocation15 + $0x38] sm:$0xff]
    %v1071 = vld [vmem:[#allocation15 + $0x40] sm:$0xff]
    %v1072 = vld [vmem:[#allocation15 + $0x48] sm:$0xff]
    %v1073 = vld [vmem:[#allocation15 + $0x50] sm:$0xff]
    %v1074 = vld [vmem:[#allocation15 + $0x58] sm:$0xff]
    %v1075 = vld [vmem:[#allocation15 + $0x60] sm:$0xff]
    %v1076 = vld [vmem:[#allocation15 + $0x68] sm:$0xff]
    %v1077 = vld [vmem:[#allocation15 + $0x70] sm:$0xff]
    %v1078 = vld [vmem:[#allocation15 + $0x78] sm:$0xff]
    %v1079 = vld [vmem:[#allocation15 + $0x80] sm:$0xff]
    %v1080 = vld [vmem:[#allocation15 + $0x88] sm:$0xff]
    %v1081 = vld [vmem:[#allocation15 + $0x90] sm:$0xff]
    %v1082 = vld [vmem:[#allocation15 + $0x98] sm:$0xff]
    %v1083 = vld [vmem:[#allocation17] sm:$0xf]
    %v1085 = vlaneseq
    %v1086 = vshrl.u32 %v1085, 7
    %v1087 = vsub.s32 0, %v1086
    %v1088 = vrot.slane %v1083, %v1087
    %v1089 = vlaneseq
    %v1090 = vshrl.u32 %v1089, 7
    %v1091 = vsub.s32 1, %v1090
    %v1092 = vrot.slane %v1083, %v1091
    %v1093 = vlaneseq
    %v1094 = vshrl.u32 %v1093, 7
    %v1095 = vsub.s32 2, %v1094
    %v1096 = vrot.slane %v1083, %v1095
    %v1097 = vlaneseq
    %v1098 = vshrl.u32 %v1097, 7
    %v1099 = vsub.s32 3, %v1098
    %v1100 = vrot.slane %v1083, %v1099
    %vm1105 = vcmask 326656
    %v1107 = vsel %vm1105, %v1061, 0
    %1109 = vmatprep.subr.mxu0 %v1064
    %1110 = vmatpush1.msra.mxu0 %v1063
    %1111 = vmatprep.subr.mxu0 %v1068
    %1112 = vmatpush1.msra.mxu0 %v1067
    %1113 = vmatprep.subr.mxu0 %v1072
    %1114 = vmatpush1.msra.mxu0 %v1071
    %1115 = vmatprep.subr.mxu0 %v1076
    %1116 = vmatpush1.msra.mxu0 %v1075
    %1117 = vmatprep.subr.mxu0 %v1080
    %1118 = vmatpush1.msra.mxu0 %v1079
    %1119 = vmatprep.subr.mxu0 0.0
    %1120 = vmatpush1.msra.mxu0 0.0
    %1121 = vmatprep.subr.mxu0 0.0
    %1122 = vmatpush1.msra.mxu0 0.0
    %1123 = vmatprep.subr.mxu0 0.0
    %1124 = vmatpush1.msra.mxu0 0.0
    %1125 = vmatprep.subr.mxu0 0.0
    %1126 = vmatpush1.msra.mxu0 0.0
    %1127 = vmatprep.subr.mxu0 0.0
    %1128 = vmatpush1.msra.mxu0 0.0
    %1129 = vmatprep.subr.mxu0 0.0
    %1130 = vmatpush1.msra.mxu0 0.0
    %1131 = vmatprep.subr.mxu0 0.0
    %1132 = vmatpush1.msra.mxu0 0.0
    %1133 = vmatprep.subr.mxu0 0.0
    %1134 = vmatpush1.msra.mxu0 0.0
    %1135 = vmatprep.subr.mxu0 0.0
    %1136 = vmatpush1.msra.mxu0 0.0
    %1137 = vmatprep.subr.mxu0 0.0
    %1138 = vmatpush1.msra.mxu0 0.0
    %1139 = vmatprep.subr.mxu0 0.0
    %1140 = vmatpush1.msra.mxu0 0.0
    %1141 = vmatprep.subr.mxu0 0.0
    %1142 = vmatpush1.msra.mxu0 0.0
    %1143 = vmatprep.subr.mxu0 0.0
    %1144 = vmatpush1.msra.mxu0 0.0
    %1145 = vmatprep.subr.mxu0 0.0
    %1146 = vmatpush1.msra.mxu0 0.0
    %1147 = vmatprep.subr.mxu0 0.0
    %1148 = vmatpush1.msra.mxu0 0.0
    %1149 = vmatprep.subr.mxu0 0.0
    %1150 = vmatpush1.msra.mxu0 0.0
    %1151 = vmatprep.subr.mxu0 0.0
    %1152 = vmatpush1.msra.mxu0 0.0
    %1153 = vmatprep.subr.mxu0 0.0
    %1154 = vmatpush1.msra.mxu0 0.0
    %1155 = vmatprep.subr.mxu0 0.0
    %1156 = vmatpush1.msra.mxu0 0.0
    %1157 = vmatprep.subr.mxu0 0.0
    %1158 = vmatpush1.msra.mxu0 0.0
    %1159 = vmatprep.subr.mxu0 0.0
    %1160 = vmatpush1.msra.mxu0 0.0
    %1161 = vmatprep.subr.mxu0 0.0
    %1162 = vmatpush1.msra.mxu0 0.0
    %1163 = vmatprep.subr.mxu0 0.0
    %1164 = vmatpush1.msra.mxu0 0.0
    %1165 = vmatprep.subr.mxu0 0.0
    %1166 = vmatpush1.msra.mxu0 0.0
    %1167 = vmatprep.subr.mxu0 0.0
    %1168 = vmatpush1.msra.mxu0 0.0
    %1169 = vmatprep.subr.mxu0 0.0
    %1170 = vmatpush1.msra.mxu0 0.0
    %1171 = vmatprep.subr.mxu0 0.0
    %1172 = vmatpush1.msra.mxu0 0.0
    %1173 = vmatprep.mubr.f32.mxu0 0.0
    %1174 = vmatmul.mubr.f32.gmra.mrb[0].mxu0 %v1107
    %v1175 = vpop.f32.mrb[0].mxu0
    %v1176 = vadd.f32 %v1088, %v1175
    %v1177 = vpop.f32.mrb[0].mxu0
    %v1178 = vadd.f32 %v1092, %v1177
    %1179 = vdwg.mxu0
    %1180 = vmatprep.subr.mxu0 %v1066
    %1181 = vmatpush1.msra.mxu0 %v1065
    %1182 = vmatprep.subr.mxu0 %v1070
    %1183 = vmatpush1.msra.mxu0 %v1069
    %1184 = vmatprep.subr.mxu0 %v1074
    %1185 = vmatpush1.msra.mxu0 %v1073
    %1186 = vmatprep.subr.mxu0 %v1078
    %1187 = vmatpush1.msra.mxu0 %v1077
    %1188 = vmatprep.subr.mxu0 %v1082
    %1189 = vmatpush1.msra.mxu0 %v1081
    %1190 = vmatprep.subr.mxu0 0.0
    %1191 = vmatpush1.msra.mxu0 0.0
    %1192 = vmatprep.subr.mxu0 0.0
    %1193 = vmatpush1.msra.mxu0 0.0
    %1194 = vmatprep.subr.mxu0 0.0
    %1195 = vmatpush1.msra.mxu0 0.0
    %1196 = vmatprep.subr.mxu0 0.0
    %1197 = vmatpush1.msra.mxu0 0.0
    %1198 = vmatprep.subr.mxu0 0.0
    %1199 = vmatpush1.msra.mxu0 0.0
    %1200 = vmatprep.subr.mxu0 0.0
    %1201 = vmatpush1.msra.mxu0 0.0
    %1202 = vmatprep.subr.mxu0 0.0
    %1203 = vmatpush1.msra.mxu0 0.0
    %1204 = vmatprep.subr.mxu0 0.0
    %1205 = vmatpush1.msra.mxu0 0.0
    %1206 = vmatprep.subr.mxu0 0.0
    %1207 = vmatpush1.msra.mxu0 0.0
    %1208 = vmatprep.subr.mxu0 0.0
    %1209 = vmatpush1.msra.mxu0 0.0
    %1210 = vmatprep.subr.mxu0 0.0
    %1211 = vmatpush1.msra.mxu0 0.0
    %1212 = vmatprep.subr.mxu0 0.0
    %1213 = vmatpush1.msra.mxu0 0.0
    %1214 = vmatprep.subr.mxu0 0.0
    %1215 = vmatpush1.msra.mxu0 0.0
    %1216 = vmatprep.subr.mxu0 0.0
    %1217 = vmatpush1.msra.mxu0 0.0
    %1218 = vmatprep.subr.mxu0 0.0
    %1219 = vmatpush1.msra.mxu0 0.0
    %1220 = vmatprep.subr.mxu0 0.0
    %1221 = vmatpush1.msra.mxu0 0.0
    %1222 = vmatprep.subr.mxu0 0.0
    %1223 = vmatpush1.msra.mxu0 0.0
    %1224 = vmatprep.subr.mxu0 0.0
    %1225 = vmatpush1.msra.mxu0 0.0
    %1226 = vmatprep.subr.mxu0 0.0
    %1227 = vmatpush1.msra.mxu0 0.0
    %1228 = vmatprep.subr.mxu0 0.0
    %1229 = vmatpush1.msra.mxu0 0.0
    %1230 = vmatprep.subr.mxu0 0.0
    %1231 = vmatpush1.msra.mxu0 0.0
    %1232 = vmatprep.subr.mxu0 0.0
    %1233 = vmatpush1.msra.mxu0 0.0
    %1234 = vmatprep.subr.mxu0 0.0
    %1235 = vmatpush1.msra.mxu0 0.0
    %1236 = vmatprep.subr.mxu0 0.0
    %1237 = vmatpush1.msra.mxu0 0.0
    %1238 = vmatprep.subr.mxu0 0.0
    %1239 = vmatpush1.msra.mxu0 0.0
    %1240 = vmatprep.subr.mxu0 0.0
    %1241 = vmatpush1.msra.mxu0 0.0
    %1242 = vmatprep.subr.mxu0 0.0
    %1243 = vmatpush1.msra.mxu0 0.0
    %1244 = vmatprep.mubr.f32.mxu0 0.0
    %1245 = vmatmul.mubr.f32.gmra.mrb[0].mxu0 %v1107
    %v1246 = vpop.f32.mrb[0].mxu0
    %v1247 = vadd.f32 %v1096, %v1246
    %v1248 = vpop.f32.mrb[0].mxu0
    %v1249 = vadd.f32 %v1100, %v1248
    %1250 = vdwg.mxu0
    %v1251 = vmax.f32 %v1176, 0.0
    %v1252 = vmax.f32 %v1178, 0.0
    %v1253 = vmax.f32 %v1247, 0.0
    %v1254 = vmax.f32 %v1249, 0.0
    %v1255 = vld [vmem:[#allocation18] sm:$0xff]
    %v1256 = vld [vmem:[#allocation18 + $0x8] sm:$0xff]
    %v1257 = vld [vmem:[#allocation18 + $0x10] sm:$0xff]
    %v1258 = vld [vmem:[#allocation18 + $0x18] sm:$0xff]
    %v1259 = vld [vmem:[#allocation18 + $0x20] sm:$0xff]
    %v1260 = vld [vmem:[#allocation18 + $0x28] sm:$0xff]
    %v1261 = vld [vmem:[#allocation18 + $0x30] sm:$0xff]
    %v1262 = vld [vmem:[#allocation18 + $0x38] sm:$0xff]
    %v1263 = vld [vmem:[#allocation18 + $0x40] sm:$0xff]
    %v1264 = vld [vmem:[#allocation18 + $0x48] sm:$0xff]
    %v1265 = vld [vmem:[#allocation18 + $0x50] sm:$0xff]
    %v1266 = vld [vmem:[#allocation18 + $0x58] sm:$0xff]
    %v1267 = vld [vmem:[#allocation18 + $0x60] sm:$0xff]
    %v1268 = vld [vmem:[#allocation18 + $0x68] sm:$0xff]
    %v1269 = vld [vmem:[#allocation18 + $0x70] sm:$0xff]
    %v1270 = vld [vmem:[#allocation18 + $0x78] sm:$0xff]
    %v1271 = vld [vmem:[#allocation18 + $0x80] sm:$0xff]
    %v1272 = vld [vmem:[#allocation18 + $0x88] sm:$0xff]
    %v1273 = vld [vmem:[#allocation18 + $0x90] sm:$0xff]
    %v1274 = vld [vmem:[#allocation18 + $0x98] sm:$0xff]
    %v1275 = vld [vmem:[#allocation18 + $0xa0] sm:$0xff]
    %v1276 = vld [vmem:[#allocation18 + $0xa8] sm:$0xff]
    %v1277 = vld [vmem:[#allocation18 + $0xb0] sm:$0xff]
    %v1278 = vld [vmem:[#allocation18 + $0xb8] sm:$0xff]
    %v1279 = vld [vmem:[#allocation18 + $0xc0] sm:$0xff]
    %v1280 = vld [vmem:[#allocation18 + $0xc8] sm:$0xff]
    %v1281 = vld [vmem:[#allocation18 + $0xd0] sm:$0xff]
    %v1282 = vld [vmem:[#allocation18 + $0xd8] sm:$0xff]
    %v1283 = vld [vmem:[#allocation18 + $0xe0] sm:$0xff]
    %v1284 = vld [vmem:[#allocation18 + $0xe8] sm:$0xff]
    %v1285 = vld [vmem:[#allocation18 + $0xf0] sm:$0xff]
    %v1286 = vld [vmem:[#allocation18 + $0xf8] sm:$0xff]
    %v1287 = vld [vmem:[#allocation18 + $0x100] sm:$0xff]
    %v1288 = vld [vmem:[#allocation18 + $0x108] sm:$0xff]
    %v1289 = vld [vmem:[#allocation18 + $0x110] sm:$0xff]
    %v1290 = vld [vmem:[#allocation18 + $0x118] sm:$0xff]
    %v1291 = vld [vmem:[#allocation18 + $0x120] sm:$0xff]
    %v1292 = vld [vmem:[#allocation18 + $0x128] sm:$0xff]
    %v1293 = vld [vmem:[#allocation18 + $0x130] sm:$0xff]
    %v1294 = vld [vmem:[#allocation18 + $0x138] sm:$0xff]
    %v1295 = vld [vmem:[#allocation18 + $0x140] sm:$0xff]
    %v1296 = vld [vmem:[#allocation18 + $0x148] sm:$0xff]
    %v1297 = vld [vmem:[#allocation18 + $0x150] sm:$0xff]
    %v1298 = vld [vmem:[#allocation18 + $0x158] sm:$0xff]
    %v1299 = vld [vmem:[#allocation18 + $0x160] sm:$0xff]
    %v1300 = vld [vmem:[#allocation18 + $0x168] sm:$0xff]
    %v1301 = vld [vmem:[#allocation18 + $0x170] sm:$0xff]
    %v1302 = vld [vmem:[#allocation18 + $0x178] sm:$0xff]
    %v1303 = vld [vmem:[#allocation18 + $0x180] sm:$0xff]
    %v1304 = vld [vmem:[#allocation18 + $0x188] sm:$0xff]
    %v1305 = vld [vmem:[#allocation18 + $0x190] sm:$0xff]
    %v1306 = vld [vmem:[#allocation18 + $0x198] sm:$0xff]
    %v1307 = vld [vmem:[#allocation18 + $0x1a0] sm:$0xff]
    %v1308 = vld [vmem:[#allocation18 + $0x1a8] sm:$0xff]
    %v1309 = vld [vmem:[#allocation18 + $0x1b0] sm:$0xff]
    %v1310 = vld [vmem:[#allocation18 + $0x1b8] sm:$0xff]
    %v1311 = vld [vmem:[#allocation18 + $0x1c0] sm:$0xff]
    %v1312 = vld [vmem:[#allocation18 + $0x1c8] sm:$0xff]
    %v1313 = vld [vmem:[#allocation18 + $0x1d0] sm:$0xff]
    %v1314 = vld [vmem:[#allocation18 + $0x1d8] sm:$0xff]
    %v1315 = vld [vmem:[#allocation18 + $0x1e0] sm:$0xff]
    %v1316 = vld [vmem:[#allocation18 + $0x1e8] sm:$0xff]
    %v1317 = vld [vmem:[#allocation18 + $0x1f0] sm:$0xff]
    %v1318 = vld [vmem:[#allocation18 + $0x1f8] sm:$0xff]
    %v1319 = vld [vmem:[#allocation18 + $0x200] sm:$0xff]
    %v1320 = vld [vmem:[#allocation18 + $0x208] sm:$0xff]
    %v1321 = vld [vmem:[#allocation18 + $0x210] sm:$0xff]
    %v1322 = vld [vmem:[#allocation18 + $0x218] sm:$0xff]
    %v1323 = vld [vmem:[#allocation18 + $0x220] sm:$0xff]
    %v1324 = vld [vmem:[#allocation18 + $0x228] sm:$0xff]
    %v1325 = vld [vmem:[#allocation18 + $0x230] sm:$0xff]
    %v1326 = vld [vmem:[#allocation18 + $0x238] sm:$0xff]
    %v1327 = vld [vmem:[#allocation18 + $0x240] sm:$0xff]
    %v1328 = vld [vmem:[#allocation18 + $0x248] sm:$0xff]
    %v1329 = vld [vmem:[#allocation18 + $0x250] sm:$0xff]
    %v1330 = vld [vmem:[#allocation18 + $0x258] sm:$0xff]
    %v1331 = vld [vmem:[#allocation18 + $0x260] sm:$0xff]
    %v1332 = vld [vmem:[#allocation18 + $0x268] sm:$0xff]
    %v1333 = vld [vmem:[#allocation18 + $0x270] sm:$0xff]
    %v1334 = vld [vmem:[#allocation18 + $0x278] sm:$0xff]
    %v1335 = vld [vmem:[#allocation18 + $0x280] sm:$0xff]
    %v1336 = vld [vmem:[#allocation18 + $0x288] sm:$0xff]
    %v1337 = vld [vmem:[#allocation18 + $0x290] sm:$0xff]
    %v1338 = vld [vmem:[#allocation18 + $0x298] sm:$0xff]
    %v1339 = vld [vmem:[#allocation18 + $0x2a0] sm:$0xff]
    %v1340 = vld [vmem:[#allocation18 + $0x2a8] sm:$0xff]
    %v1341 = vld [vmem:[#allocation18 + $0x2b0] sm:$0xff]
    %v1342 = vld [vmem:[#allocation18 + $0x2b8] sm:$0xff]
    %v1343 = vld [vmem:[#allocation18 + $0x2c0] sm:$0xff]
    %v1344 = vld [vmem:[#allocation18 + $0x2c8] sm:$0xff]
    %v1345 = vld [vmem:[#allocation18 + $0x2d0] sm:$0xff]
    %v1346 = vld [vmem:[#allocation18 + $0x2d8] sm:$0xff]
    %v1347 = vld [vmem:[#allocation18 + $0x2e0] sm:$0xff]
    %v1348 = vld [vmem:[#allocation18 + $0x2e8] sm:$0xff]
    %v1349 = vld [vmem:[#allocation18 + $0x2f0] sm:$0xff]
    %v1350 = vld [vmem:[#allocation18 + $0x2f8] sm:$0xff]
    %v1351 = vld [vmem:[#allocation18 + $0x300] sm:$0xff]
    %v1352 = vld [vmem:[#allocation18 + $0x308] sm:$0xff]
    %v1353 = vld [vmem:[#allocation18 + $0x310] sm:$0xff]
    %v1354 = vld [vmem:[#allocation18 + $0x318] sm:$0xff]
    %v1355 = vld [vmem:[#allocation18 + $0x320] sm:$0xff]
    %v1356 = vld [vmem:[#allocation18 + $0x328] sm:$0xff]
    %v1357 = vld [vmem:[#allocation18 + $0x330] sm:$0xff]
    %v1358 = vld [vmem:[#allocation18 + $0x338] sm:$0xff]
    %v1359 = vld [vmem:[#allocation18 + $0x340] sm:$0xff]
    %v1360 = vld [vmem:[#allocation18 + $0x348] sm:$0xff]
    %v1361 = vld [vmem:[#allocation18 + $0x350] sm:$0xff]
    %v1362 = vld [vmem:[#allocation18 + $0x358] sm:$0xff]
    %v1363 = vld [vmem:[#allocation18 + $0x360] sm:$0xff]
    %v1364 = vld [vmem:[#allocation18 + $0x368] sm:$0xff]
    %v1365 = vld [vmem:[#allocation18 + $0x370] sm:$0xff]
    %v1366 = vld [vmem:[#allocation18 + $0x378] sm:$0xff]
    %v1367 = vld [vmem:[#allocation18 + $0x380] sm:$0xff]
    %v1368 = vld [vmem:[#allocation18 + $0x388] sm:$0xff]
    %v1369 = vld [vmem:[#allocation18 + $0x390] sm:$0xff]
    %v1370 = vld [vmem:[#allocation18 + $0x398] sm:$0xff]
    %v1371 = vld [vmem:[#allocation18 + $0x3a0] sm:$0xff]
    %v1372 = vld [vmem:[#allocation18 + $0x3a8] sm:$0xff]
    %v1373 = vld [vmem:[#allocation18 + $0x3b0] sm:$0xff]
    %v1374 = vld [vmem:[#allocation18 + $0x3b8] sm:$0xff]
    %v1375 = vld [vmem:[#allocation18 + $0x3c0] sm:$0xff]
    %v1376 = vld [vmem:[#allocation18 + $0x3c8] sm:$0xff]
    %v1377 = vld [vmem:[#allocation18 + $0x3d0] sm:$0xff]
    %v1378 = vld [vmem:[#allocation18 + $0x3d8] sm:$0xff]
    %v1379 = vld [vmem:[#allocation18 + $0x3e0] sm:$0xff]
    %v1380 = vld [vmem:[#allocation18 + $0x3e8] sm:$0xff]
    %v1381 = vld [vmem:[#allocation18 + $0x3f0] sm:$0xff]
    %v1382 = vld [vmem:[#allocation18 + $0x3f8] sm:$0xff]
    %v1383 = vld [vmem:[#allocation20] sm:$0x3]
    %v1385 = vlaneseq
    %v1386 = vshrl.u32 %v1385, 7
    %v1387 = vsub.s32 0, %v1386
    %v1388 = vrot.slane %v1383, %v1387
    %v1389 = vlaneseq
    %v1390 = vshrl.u32 %v1389, 7
    %v1391 = vsub.s32 1, %v1390
    %v1392 = vrot.slane %v1383, %v1391
    %1395 = vmatprep.subr.mxu0 %v1256
    %1396 = vmatpush1.msra.mxu0 %v1255
    %1397 = vmatprep.subr.mxu0 %v1258
    %1398 = vmatpush1.msra.mxu0 %v1257
    %1399 = vmatprep.subr.mxu0 %v1260
    %1400 = vmatpush1.msra.mxu0 %v1259
    %1401 = vmatprep.subr.mxu0 %v1262
    %1402 = vmatpush1.msra.mxu0 %v1261
    %1403 = vmatprep.subr.mxu0 %v1264
    %1404 = vmatpush1.msra.mxu0 %v1263
    %1405 = vmatprep.subr.mxu0 %v1266
    %1406 = vmatpush1.msra.mxu0 %v1265
    %1407 = vmatprep.subr.mxu0 %v1268
    %1408 = vmatpush1.msra.mxu0 %v1267
    %1409 = vmatprep.subr.mxu0 %v1270
    %1410 = vmatpush1.msra.mxu0 %v1269
    %1411 = vmatprep.subr.mxu0 %v1272
    %1412 = vmatpush1.msra.mxu0 %v1271
    %1413 = vmatprep.subr.mxu0 %v1274
    %1414 = vmatpush1.msra.mxu0 %v1273
    %1415 = vmatprep.subr.mxu0 %v1276
    %1416 = vmatpush1.msra.mxu0 %v1275
    %1417 = vmatprep.subr.mxu0 %v1278
    %1418 = vmatpush1.msra.mxu0 %v1277
    %1419 = vmatprep.subr.mxu0 %v1280
    %1420 = vmatpush1.msra.mxu0 %v1279
    %1421 = vmatprep.subr.mxu0 %v1282
    %1422 = vmatpush1.msra.mxu0 %v1281
    %1423 = vmatprep.subr.mxu0 %v1284
    %1424 = vmatpush1.msra.mxu0 %v1283
    %1425 = vmatprep.subr.mxu0 %v1286
    %1426 = vmatpush1.msra.mxu0 %v1285
    %1427 = vmatprep.subr.mxu0 %v1288
    %1428 = vmatpush1.msra.mxu0 %v1287
    %1429 = vmatprep.subr.mxu0 %v1290
    %1430 = vmatpush1.msra.mxu0 %v1289
    %1431 = vmatprep.subr.mxu0 %v1292
    %1432 = vmatpush1.msra.mxu0 %v1291
    %1433 = vmatprep.subr.mxu0 %v1294
    %1434 = vmatpush1.msra.mxu0 %v1293
    %1435 = vmatprep.subr.mxu0 %v1296
    %1436 = vmatpush1.msra.mxu0 %v1295
    %1437 = vmatprep.subr.mxu0 %v1298
    %1438 = vmatpush1.msra.mxu0 %v1297
    %1439 = vmatprep.subr.mxu0 %v1300
    %1440 = vmatpush1.msra.mxu0 %v1299
    %1441 = vmatprep.subr.mxu0 %v1302
    %1442 = vmatpush1.msra.mxu0 %v1301
    %1443 = vmatprep.subr.mxu0 %v1304
    %1444 = vmatpush1.msra.mxu0 %v1303
    %1445 = vmatprep.subr.mxu0 %v1306
    %1446 = vmatpush1.msra.mxu0 %v1305
    %1447 = vmatprep.subr.mxu0 %v1308
    %1448 = vmatpush1.msra.mxu0 %v1307
    %1449 = vmatprep.subr.mxu0 %v1310
    %1450 = vmatpush1.msra.mxu0 %v1309
    %1451 = vmatprep.subr.mxu0 %v1312
    %1452 = vmatpush1.msra.mxu0 %v1311
    %1453 = vmatprep.subr.mxu0 %v1314
    %1454 = vmatpush1.msra.mxu0 %v1313
    %1455 = vmatprep.subr.mxu0 %v1316
    %1456 = vmatpush1.msra.mxu0 %v1315
    %1457 = vmatprep.subr.mxu0 %v1318
    %1458 = vmatpush1.msra.mxu0 %v1317
    %1459 = vmatprep.mubr.f32.mxu0 %v1252
    %1460 = vmatmul.mubr.f32.gmra.mrb[0].mxu0 %v1251
    %v1461 = vpop.f32.mrb[0].mxu0
    %v1462 = vadd.f32 %v1388, %v1461
    %v1463 = vpop.f32.mrb[0].mxu0
    %v1464 = vadd.f32 %v1392, %v1463
    %1465 = vdwg.mxu0
    %1466 = vmatprep.subr.mxu0 %v1320
    %1467 = vmatpush1.msra.mxu0 %v1319
    %1468 = vmatprep.subr.mxu0 %v1322
    %1469 = vmatpush1.msra.mxu0 %v1321
    %1470 = vmatprep.subr.mxu0 %v1324
    %1471 = vmatpush1.msra.mxu0 %v1323
    %1472 = vmatprep.subr.mxu0 %v1326
    %1473 = vmatpush1.msra.mxu0 %v1325
    %1474 = vmatprep.subr.mxu0 %v1328
    %1475 = vmatpush1.msra.mxu0 %v1327
    %1476 = vmatprep.subr.mxu0 %v1330
    %1477 = vmatpush1.msra.mxu0 %v1329
    %1478 = vmatprep.subr.mxu0 %v1332
    %1479 = vmatpush1.msra.mxu0 %v1331
    %1480 = vmatprep.subr.mxu0 %v1334
    %1481 = vmatpush1.msra.mxu0 %v1333
    %1482 = vmatprep.subr.mxu0 %v1336
    %1483 = vmatpush1.msra.mxu0 %v1335
    %1484 = vmatprep.subr.mxu0 %v1338
    %1485 = vmatpush1.msra.mxu0 %v1337
    %1486 = vmatprep.subr.mxu0 %v1340
    %1487 = vmatpush1.msra.mxu0 %v1339
    %1488 = vmatprep.subr.mxu0 %v1342
    %1489 = vmatpush1.msra.mxu0 %v1341
    %1490 = vmatprep.subr.mxu0 %v1344
    %1491 = vmatpush1.msra.mxu0 %v1343
    %1492 = vmatprep.subr.mxu0 %v1346
    %1493 = vmatpush1.msra.mxu0 %v1345
    %1494 = vmatprep.subr.mxu0 %v1348
    %1495 = vmatpush1.msra.mxu0 %v1347
    %1496 = vmatprep.subr.mxu0 %v1350
    %1497 = vmatpush1.msra.mxu0 %v1349
    %1498 = vmatprep.subr.mxu0 %v1352
    %1499 = vmatpush1.msra.mxu0 %v1351
    %1500 = vmatprep.subr.mxu0 %v1354
    %1501 = vmatpush1.msra.mxu0 %v1353
    %1502 = vmatprep.subr.mxu0 %v1356
    %1503 = vmatpush1.msra.mxu0 %v1355
    %1504 = vmatprep.subr.mxu0 %v1358
    %1505 = vmatpush1.msra.mxu0 %v1357
    %1506 = vmatprep.subr.mxu0 %v1360
    %1507 = vmatpush1.msra.mxu0 %v1359
    %1508 = vmatprep.subr.mxu0 %v1362
    %1509 = vmatpush1.msra.mxu0 %v1361
    %1510 = vmatprep.subr.mxu0 %v1364
    %1511 = vmatpush1.msra.mxu0 %v1363
    %1512 = vmatprep.subr.mxu0 %v1366
    %1513 = vmatpush1.msra.mxu0 %v1365
    %1514 = vmatprep.subr.mxu0 %v1368
    %1515 = vmatpush1.msra.mxu0 %v1367
    %1516 = vmatprep.subr.mxu0 %v1370
    %1517 = vmatpush1.msra.mxu0 %v1369
    %1518 = vmatprep.subr.mxu0 %v1372
    %1519 = vmatpush1.msra.mxu0 %v1371
    %1520 = vmatprep.subr.mxu0 %v1374
    %1521 = vmatpush1.msra.mxu0 %v1373
    %1522 = vmatprep.subr.mxu0 %v1376
    %1523 = vmatpush1.msra.mxu0 %v1375
    %1524 = vmatprep.subr.mxu0 %v1378
    %1525 = vmatpush1.msra.mxu0 %v1377
    %1526 = vmatprep.subr.mxu0 %v1380
    %1527 = vmatpush1.msra.mxu0 %v1379
    %1528 = vmatprep.subr.mxu0 %v1382
    %1529 = vmatpush1.msra.mxu0 %v1381
    %1530 = vmatprep.mubr.f32.mxu0 %v1254
    %1531 = vmatmul.mubr.f32.gmra.mrb[0].mxu0 %v1253
    %v1532 = vpop.f32.mrb[0].mxu0
    %v1533 = vadd.f32 %v1462, %v1532
    %v1534 = vpop.f32.mrb[0].mxu0
    %v1535 = vadd.f32 %v1464, %v1534
    %1536 = vdwg.mxu0
    %v1537 = vmax.f32 %v1533, 0.0
    %v1538 = vmax.f32 %v1535, 0.0
    %v1539 = vld [vmem:[%s39] sm:$0xff]
    %v1540 = vld [vmem:[%s39 + $0x8] sm:$0xff]
    %v1541 = vld [vmem:[%s39 + $0x10] sm:$0xff]
    %v1542 = vld [vmem:[%s39 + $0x18] sm:$0xff]
    %v1543 = vld [vmem:[%s39 + $0x20] sm:$0xff]
    %v1544 = vld [vmem:[%s39 + $0x28] sm:$0xff]
    %v1545 = vld [vmem:[%s39 + $0x30] sm:$0xff]
    %v1546 = vld [vmem:[%s39 + $0x38] sm:$0xff]
    %v1547 = vld [vmem:[%s39 + $0x40] sm:$0xff]
    %v1548 = vld [vmem:[%s39 + $0x48] sm:$0xff]
    %v1549 = vld [vmem:[%s39 + $0x50] sm:$0xff]
    %v1550 = vld [vmem:[%s39 + $0x58] sm:$0xff]
    %v1551 = vld [vmem:[%s39 + $0x60] sm:$0xff]
    %v1552 = vld [vmem:[%s39 + $0x68] sm:$0xff]
    %v1553 = vld [vmem:[%s39 + $0x70] sm:$0xff]
    %v1554 = vld [vmem:[%s39 + $0x78] sm:$0xff]
    %v1555 = vld [vmem:[%s39 + $0x80] sm:$0xff]
    %v1556 = vld [vmem:[%s39 + $0x88] sm:$0xff]
    %v1557 = vld [vmem:[%s39 + $0x90] sm:$0xff]
    %v1558 = vld [vmem:[%s39 + $0x98] sm:$0xff]
    %v1559 = vld [vmem:[%s39 + $0xa0] sm:$0xff]
    %v1560 = vld [vmem:[%s39 + $0xa8] sm:$0xff]
    %v1561 = vld [vmem:[%s39 + $0xb0] sm:$0xff]
    %v1562 = vld [vmem:[%s39 + $0xb8] sm:$0xff]
    %v1563 = vld [vmem:[%s39 + $0xc0] sm:$0xff]
    %v1564 = vld [vmem:[%s39 + $0xc8] sm:$0xff]
    %v1565 = vld [vmem:[%s39 + $0xd0] sm:$0xff]
    %v1566 = vld [vmem:[%s39 + $0xd8] sm:$0xff]
    %v1567 = vld [vmem:[%s39 + $0xe0] sm:$0xff]
    %v1568 = vld [vmem:[%s39 + $0xe8] sm:$0xff]
    %v1569 = vld [vmem:[%s39 + $0xf0] sm:$0xff]
    %v1570 = vld [vmem:[%s39 + $0xf8] sm:$0xff]
    %v1571 = vld [vmem:[#allocation21] sm:$0x1]
    %v1573 = vlaneseq
    %v1574 = vshrl.u32 %v1573, 7
    %v1575 = vsub.s32 0, %v1574
    %v1576 = vrot.slane %v1571, %v1575
    %1578 = vmatprep.subr.mxu0 0.0
    %1579 = vmatpush1.msra.mxu0 %v1539
    %1580 = vmatprep.subr.mxu0 0.0
    %1581 = vmatpush1.msra.mxu0 %v1540
    %1582 = vmatprep.subr.mxu0 0.0
    %1583 = vmatpush1.msra.mxu0 %v1541
    %1584 = vmatprep.subr.mxu0 0.0
    %1585 = vmatpush1.msra.mxu0 %v1542
    %1586 = vmatprep.subr.mxu0 0.0
    %1587 = vmatpush1.msra.mxu0 %v1543
    %1588 = vmatprep.subr.mxu0 0.0
    %1589 = vmatpush1.msra.mxu0 %v1544
    %1590 = vmatprep.subr.mxu0 0.0
    %1591 = vmatpush1.msra.mxu0 %v1545
    %1592 = vmatprep.subr.mxu0 0.0
    %1593 = vmatpush1.msra.mxu0 %v1546
    %1594 = vmatprep.subr.mxu0 0.0
    %1595 = vmatpush1.msra.mxu0 %v1547
    %1596 = vmatprep.subr.mxu0 0.0
    %1597 = vmatpush1.msra.mxu0 %v1548
    %1598 = vmatprep.subr.mxu0 0.0
    %1599 = vmatpush1.msra.mxu0 %v1549
    %1600 = vmatprep.subr.mxu0 0.0
    %1601 = vmatpush1.msra.mxu0 %v1550
    %1602 = vmatprep.subr.mxu0 0.0
    %1603 = vmatpush1.msra.mxu0 %v1551
    %1604 = vmatprep.subr.mxu0 0.0
    %1605 = vmatpush1.msra.mxu0 %v1552
    %1606 = vmatprep.subr.mxu0 0.0
    %1607 = vmatpush1.msra.mxu0 %v1553
    %1608 = vmatprep.subr.mxu0 0.0
    %1609 = vmatpush1.msra.mxu0 %v1554
    %1610 = vmatprep.subr.mxu0 0.0
    %1611 = vmatpush1.msra.mxu0 %v1555
    %1612 = vmatprep.subr.mxu0 0.0
    %1613 = vmatpush1.msra.mxu0 %v1556
    %1614 = vmatprep.subr.mxu0 0.0
    %1615 = vmatpush1.msra.mxu0 %v1557
    %1616 = vmatprep.subr.mxu0 0.0
    %1617 = vmatpush1.msra.mxu0 %v1558
    %1618 = vmatprep.subr.mxu0 0.0
    %1619 = vmatpush1.msra.mxu0 %v1559
    %1620 = vmatprep.subr.mxu0 0.0
    %1621 = vmatpush1.msra.mxu0 %v1560
    %1622 = vmatprep.subr.mxu0 0.0
    %1623 = vmatpush1.msra.mxu0 %v1561
    %1624 = vmatprep.subr.mxu0 0.0
    %1625 = vmatpush1.msra.mxu0 %v1562
    %1626 = vmatprep.subr.mxu0 0.0
    %1627 = vmatpush1.msra.mxu0 %v1563
    %1628 = vmatprep.subr.mxu0 0.0
    %1629 = vmatpush1.msra.mxu0 %v1564
    %1630 = vmatprep.subr.mxu0 0.0
    %1631 = vmatpush1.msra.mxu0 %v1565
    %1632 = vmatprep.subr.mxu0 0.0
    %1633 = vmatpush1.msra.mxu0 %v1566
    %1634 = vmatprep.subr.mxu0 0.0
    %1635 = vmatpush1.msra.mxu0 %v1567
    %1636 = vmatprep.subr.mxu0 0.0
    %1637 = vmatpush1.msra.mxu0 %v1568
    %1638 = vmatprep.subr.mxu0 0.0
    %1639 = vmatpush1.msra.mxu0 %v1569
    %1640 = vmatprep.subr.mxu0 0.0
    %1641 = vmatpush1.msra.mxu0 %v1570
    %1642 = vmatprep.mubr.f32.mxu0 %v1538
    %1643 = vmatmul.mubr.f32.gmra.mrb[0].mxu0 %v1537
    %v1644 = vpop.f32.mrb[0].mxu0
    %v1645 = vadd.f32 %v1576, %v1644
    %v1646 = vpop.f32.mrb[0].mxu0
    %1647 = vdwg.mxu0
    %v1648 = vmax.f32 %v1645, 0.0
    %v1649 = vld [vmem:[%s43] sm:$0xff]
    %v1650 = vld [vmem:[%s43 + $0x8] sm:$0xff]
    %v1651 = vld [vmem:[%s43 + $0x10] sm:$0xff]
    %v1652 = vld [vmem:[%s43 + $0x18] sm:$0xff]
    %v1653 = vld [vmem:[%s43 + $0x20] sm:$0xff]
    %v1654 = vld [vmem:[%s43 + $0x28] sm:$0xff]
    %v1655 = vld [vmem:[%s43 + $0x30] sm:$0xff]
    %v1656 = vld [vmem:[%s43 + $0x38] sm:$0xff]
    %v1657 = vld [vmem:[#allocation23] sm:$0x1]
    %v1659 = vlaneseq
    %v1660 = vshrl.u32 %v1659, 7
    %v1661 = vsub.s32 0, %v1660
    %v1662 = vrot.slane %v1657, %v1661
    %v1665 = vsel %vm897, %v1648, 0
    %1667 = vmatprep.subr.mxu0 0.0
    %1668 = vmatpush1.msra.mxu0 %v1649
    %1669 = vmatprep.subr.mxu0 0.0
    %1670 = vmatpush1.msra.mxu0 %v1650
    %1671 = vmatprep.subr.mxu0 0.0
    %1672 = vmatpush1.msra.mxu0 %v1651
    %1673 = vmatprep.subr.mxu0 0.0
    %1674 = vmatpush1.msra.mxu0 %v1652
    %1675 = vmatprep.subr.mxu0 0.0
    %1676 = vmatpush1.msra.mxu0 %v1653
    %1677 = vmatprep.subr.mxu0 0.0
    %1678 = vmatpush1.msra.mxu0 %v1654
    %1679 = vmatprep.subr.mxu0 0.0
    %1680 = vmatpush1.msra.mxu0 %v1655
    %1681 = vmatprep.subr.mxu0 0.0
    %1682 = vmatpush1.msra.mxu0 %v1656
    %1683 = vmatprep.subr.mxu0 0.0
    %1684 = vmatpush1.msra.mxu0 0.0
    %1685 = vmatprep.subr.mxu0 0.0
    %1686 = vmatpush1.msra.mxu0 0.0
    %1687 = vmatprep.subr.mxu0 0.0
    %1688 = vmatpush1.msra.mxu0 0.0
    %1689 = vmatprep.subr.mxu0 0.0
    %1690 = vmatpush1.msra.mxu0 0.0
    %1691 = vmatprep.subr.mxu0 0.0
    %1692 = vmatpush1.msra.mxu0 0.0
    %1693 = vmatprep.subr.mxu0 0.0
    %1694 = vmatpush1.msra.mxu0 0.0
    %1695 = vmatprep.subr.mxu0 0.0
    %1696 = vmatpush1.msra.mxu0 0.0
    %1697 = vmatprep.subr.mxu0 0.0
    %1698 = vmatpush1.msra.mxu0 0.0
    %1699 = vmatprep.subr.mxu0 0.0
    %1700 = vmatpush1.msra.mxu0 0.0
    %1701 = vmatprep.subr.mxu0 0.0
    %1702 = vmatpush1.msra.mxu0 0.0
    %1703 = vmatprep.subr.mxu0 0.0
    %1704 = vmatpush1.msra.mxu0 0.0
    %1705 = vmatprep.subr.mxu0 0.0
    %1706 = vmatpush1.msra.mxu0 0.0
    %1707 = vmatprep.subr.mxu0 0.0
    %1708 = vmatpush1.msra.mxu0 0.0
    %1709 = vmatprep.subr.mxu0 0.0
    %1710 = vmatpush1.msra.mxu0 0.0
    %1711 = vmatprep.subr.mxu0 0.0
    %1712 = vmatpush1.msra.mxu0 0.0
    %1713 = vmatprep.subr.mxu0 0.0
    %1714 = vmatpush1.msra.mxu0 0.0
    %1715 = vmatprep.subr.mxu0 0.0
    %1716 = vmatpush1.msra.mxu0 0.0
    %1717 = vmatprep.subr.mxu0 0.0
    %1718 = vmatpush1.msra.mxu0 0.0
    %1719 = vmatprep.subr.mxu0 0.0
    %1720 = vmatpush1.msra.mxu0 0.0
    %1721 = vmatprep.subr.mxu0 0.0
    %1722 = vmatpush1.msra.mxu0 0.0
    %1723 = vmatprep.subr.mxu0 0.0
    %1724 = vmatpush1.msra.mxu0 0.0
    %1725 = vmatprep.subr.mxu0 0.0
    %1726 = vmatpush1.msra.mxu0 0.0
    %1727 = vmatprep.subr.mxu0 0.0
    %1728 = vmatpush1.msra.mxu0 0.0
    %1729 = vmatprep.subr.mxu0 0.0
    %1730 = vmatpush1.msra.mxu0 0.0
    %1731 = vmatprep.mubr.f32.mxu0 0.0
    %1732 = vmatmul.mubr.f32.gmra.mrb[0].mxu0 %v1665
    %v1733 = vpop.f32.mrb[0].mxu0
    %v1734 = vadd.f32 %v1662, %v1733
    %v1735 = vpop.f32.mrb[0].mxu0
    %1736 = vdwg.mxu0
    %v1737 = vld [vmem:[%s47] sm:$0xff]
    %v1738 = vld [vmem:[%s47 + $0x8] sm:$0xff]
    %v1739 = vld [vmem:[%s47 + $0x10] sm:$0xff]
    %v1740 = vld [vmem:[%s47 + $0x18] sm:$0xff]
    %v1741 = vld [vmem:[%s47 + $0x20] sm:$0xff]
    %v1742 = vld [vmem:[%s47 + $0x28] sm:$0xff]
    %v1743 = vld [vmem:[%s47 + $0x30] sm:$0xff]
    %v1744 = vld [vmem:[%s47 + $0x38] sm:$0xff]
    %v1745 = vld [vmem:[#allocation24] sm:$0x1]
    %v1747 = vlaneseq
    %v1748 = vshrl.u32 %v1747, 7
    %v1749 = vsub.s32 0, %v1748
    %v1750 = vrot.slane %v1745, %v1749
    %1752 = vmatprep.subr.mxu0 0.0
    %1753 = vmatpush1.msra.mxu0 %v1737
    %1754 = vmatprep.subr.mxu0 0.0
    %1755 = vmatpush1.msra.mxu0 %v1738
    %1756 = vmatprep.subr.mxu0 0.0
    %1757 = vmatpush1.msra.mxu0 %v1739
    %1758 = vmatprep.subr.mxu0 0.0
    %1759 = vmatpush1.msra.mxu0 %v1740
    %1760 = vmatprep.subr.mxu0 0.0
    %1761 = vmatpush1.msra.mxu0 %v1741
    %1762 = vmatprep.subr.mxu0 0.0
    %1763 = vmatpush1.msra.mxu0 %v1742
    %1764 = vmatprep.subr.mxu0 0.0
    %1765 = vmatpush1.msra.mxu0 %v1743
    %1766 = vmatprep.subr.mxu0 0.0
    %1767 = vmatpush1.msra.mxu0 %v1744
    %1768 = vmatprep.subr.mxu0 0.0
    %1769 = vmatpush1.msra.mxu0 0.0
    %1770 = vmatprep.subr.mxu0 0.0
    %1771 = vmatpush1.msra.mxu0 0.0
    %1772 = vmatprep.subr.mxu0 0.0
    %1773 = vmatpush1.msra.mxu0 0.0
    %1774 = vmatprep.subr.mxu0 0.0
    %1775 = vmatpush1.msra.mxu0 0.0
    %1776 = vmatprep.subr.mxu0 0.0
    %1777 = vmatpush1.msra.mxu0 0.0
    %1778 = vmatprep.subr.mxu0 0.0
    %1779 = vmatpush1.msra.mxu0 0.0
    %1780 = vmatprep.subr.mxu0 0.0
    %1781 = vmatpush1.msra.mxu0 0.0
    %1782 = vmatprep.subr.mxu0 0.0
    %1783 = vmatpush1.msra.mxu0 0.0
    %1784 = vmatprep.subr.mxu0 0.0
    %1785 = vmatpush1.msra.mxu0 0.0
    %1786 = vmatprep.subr.mxu0 0.0
    %1787 = vmatpush1.msra.mxu0 0.0
    %1788 = vmatprep.subr.mxu0 0.0
    %1789 = vmatpush1.msra.mxu0 0.0
    %1790 = vmatprep.subr.mxu0 0.0
    %1791 = vmatpush1.msra.mxu0 0.0
    %1792 = vmatprep.subr.mxu0 0.0
    %1793 = vmatpush1.msra.mxu0 0.0
    %1794 = vmatprep.subr.mxu0 0.0
    %1795 = vmatpush1.msra.mxu0 0.0
    %1796 = vmatprep.subr.mxu0 0.0
    %1797 = vmatpush1.msra.mxu0 0.0
    %1798 = vmatprep.subr.mxu0 0.0
    %1799 = vmatpush1.msra.mxu0 0.0
    %1800 = vmatprep.subr.mxu0 0.0
    %1801 = vmatpush1.msra.mxu0 0.0
    %1802 = vmatprep.subr.mxu0 0.0
    %1803 = vmatpush1.msra.mxu0 0.0
    %1804 = vmatprep.subr.mxu0 0.0
    %1805 = vmatpush1.msra.mxu0 0.0
    %1806 = vmatprep.subr.mxu0 0.0
    %1807 = vmatpush1.msra.mxu0 0.0
    %1808 = vmatprep.subr.mxu0 0.0
    %1809 = vmatpush1.msra.mxu0 0.0
    %1810 = vmatprep.subr.mxu0 0.0
    %1811 = vmatpush1.msra.mxu0 0.0
    %1812 = vmatprep.subr.mxu0 0.0
    %1813 = vmatpush1.msra.mxu0 0.0
    %1814 = vmatprep.subr.mxu0 0.0
    %1815 = vmatpush1.msra.mxu0 0.0
    %1816 = vmatprep.mubr.f32.mxu0 0.0
    %1817 = vmatmul.mubr.f32.gmra.mrb[0].mxu0 %v1665
    %v1818 = vpop.f32.mrb[0].mxu0
    %v1819 = vadd.f32 %v1750, %v1818
    %v1820 = vpop.f32.mrb[0].mxu0
    %1821 = vdwg.mxu0
    %v1822 = vmul.f32 %v1819, 0.5
    %v1823 = vmul.f32 %v1822, 1.442695
    %v1824 = vpow.pop %v1823
    %v1825 = vmul.f32 %v1062, %v1824
    %v1826 = vadd.f32 %v1734, %v1825
    %vm1827 = vcmask 130048
    %1828 = vst.msk [vmem:[#allocation27] sm:$0xff] %vm1827, %v1060
    %vm1829 = vcmask 128000
    %1830 = vst.msk [vmem:[#allocation28] sm:$0x3f] %vm1829, %v1826
    %v1831 = vmul.f32 %v1060, %v1060
    %v1832 = vsel %vm1827, %v1831, 0.0
    %1833 = vadd.xlane.f32.xlu0 %v1832
    %v1834 = vpop.xlane.xlu0 %1833
    %v1835 = vmax.f32 %v1834, 1e-24
    %v1836 = vrsqrt.pop %v1835
    %v1837 = vmul.f32 %v1826, %v1826
    %v1838 = vsel %vm1829, %v1837, 0.0
    %1839 = vadd.xlane.f32.xlu0 %v1838
    %v1840 = vpop.xlane.xlu0 %1839
    %v1841 = vmax.f32 %v1840, 1e-24
    %v1842 = vrsqrt.pop %v1841
    %v1843 = vmul.f32 %v1060, %v1836
    %v1844 = vmul.f32 %v1826, %v1842
    %v1846 = vsel %vm1827, %v1843, 0
    %v1849 = vsel %vm1827, %v1844, 0
    %1851 = vmatprep.subr.mxu0 0.0
    %1852 = vmatpush1.xpose.msra.mxu0 %v1849
    %1853 = vmatprep.subr.mxu0 0.0
    %1854 = vmatpush1.xpose.msra.mxu0 0.0
    %1855 = vmatprep.subr.mxu0 0.0
    %1856 = vmatpush1.xpose.msra.mxu0 0.0
    %1857 = vmatprep.subr.mxu0 0.0
    %1858 = vmatpush1.xpose.msra.mxu0 0.0
    %1859 = vmatprep.subr.mxu0 0.0
    %1860 = vmatpush1.xpose.msra.mxu0 0.0
    %1861 = vmatprep.subr.mxu0 0.0
    %1862 = vmatpush1.xpose.msra.mxu0 0.0
    %1863 = vmatprep.subr.mxu0 0.0
    %1864 = vmatpush1.xpose.msra.mxu0 0.0
    %1865 = vmatprep.subr.mxu0 0.0
    %1866 = vmatpush1.xpose.msra.mxu0 0.0
    %1867 = vmatprep.subr.mxu0 0.0
    %1868 = vmatpush1.xpose.msra.mxu0 0.0
    %1869 = vmatprep.subr.mxu0 0.0
    %1870 = vmatpush1.xpose.msra.mxu0 0.0
    %1871 = vmatprep.subr.mxu0 0.0
    %1872 = vmatpush1.xpose.msra.mxu0 0.0
    %1873 = vmatprep.subr.mxu0 0.0
    %1874 = vmatpush1.xpose.msra.mxu0 0.0
    %1875 = vmatprep.subr.mxu0 0.0
    %1876 = vmatpush1.xpose.msra.mxu0 0.0
    %1877 = vmatprep.subr.mxu0 0.0
    %1878 = vmatpush1.xpose.msra.mxu0 0.0
    %1879 = vmatprep.subr.mxu0 0.0
    %1880 = vmatpush1.xpose.msra.mxu0 0.0
    %1881 = vmatprep.subr.mxu0 0.0
    %1882 = vmatpush1.xpose.msra.mxu0 0.0
    %1883 = vmatprep.subr.mxu0 0.0
    %1884 = vmatpush1.xpose.msra.mxu0 0.0
    %1885 = vmatprep.subr.mxu0 0.0
    %1886 = vmatpush1.xpose.msra.mxu0 0.0
    %1887 = vmatprep.subr.mxu0 0.0
    %1888 = vmatpush1.xpose.msra.mxu0 0.0
    %1889 = vmatprep.subr.mxu0 0.0
    %1890 = vmatpush1.xpose.msra.mxu0 0.0
    %1891 = vmatprep.subr.mxu0 0.0
    %1892 = vmatpush1.xpose.msra.mxu0 0.0
    %1893 = vmatprep.subr.mxu0 0.0
    %1894 = vmatpush1.xpose.msra.mxu0 0.0
    %1895 = vmatprep.subr.mxu0 0.0
    %1896 = vmatpush1.xpose.msra.mxu0 0.0
    %1897 = vmatprep.subr.mxu0 0.0
    %1898 = vmatpush1.xpose.msra.mxu0 0.0
    %1899 = vmatprep.subr.mxu0 0.0
    %1900 = vmatpush1.xpose.msra.mxu0 0.0
    %1901 = vmatprep.subr.mxu0 0.0
    %1902 = vmatpush1.xpose.msra.mxu0 0.0
    %1903 = vmatprep.subr.mxu0 0.0
    %1904 = vmatpush1.xpose.msra.mxu0 0.0
    %1905 = vmatprep.subr.mxu0 0.0
    %1906 = vmatpush1.xpose.msra.mxu0 0.0
    %1907 = vmatprep.subr.mxu0 0.0
    %1908 = vmatpush1.xpose.msra.mxu0 0.0
    %1909 = vmatprep.subr.mxu0 0.0
    %1910 = vmatpush1.xpose.msra.mxu0 0.0
    %1911 = vmatprep.subr.mxu0 0.0
    %1912 = vmatpush1.xpose.msra.mxu0 0.0
    %1913 = vmatprep.subr.mxu0 0.0
    %1914 = vmatpush1.xpose.msra.mxu0 0.0
    %1915 = vmatprep.mubr.f32.mxu0 0.0
    %1916 = vmatmul.mubr.f32.gmra.mrb[0].mxu0 %v1846
    %v1917 = vpop.f32.mrb[0].mxu0
    %v1918 = vadd.f32 0.0, %v1917
    %v1919 = vpop.f32.mrb[0].mxu0
    %1920 = vdwg.mxu0
    %v1921 = vlaneseq
    %v1922 = vand.u32 %v1921, 127
    %v1923 = vld [vmem:[%s1] sm:$0xff]
    %1924 = vset.pattern.permute.xlu0 0
    %1925 = vperm.xlu0 %1924, %v1923
    %v1926 = vpop.permute.xlu0 %1925
    %vm1927 = vcmp.eq.s32.totalorder %v1922, %v1926
    %v1928 = vsel %vm1927, 1, 0
    %v1929 = vcvt.s32.f32 %v1928
    %v1930 = vld [vmem:[%s3] sm:$0xff]
    %1931 = vset.pattern.permute.xlu0 0
    %1932 = vperm.xlu0 %1931, %v1930
    %v1933 = vpop.permute.xlu0 %1932
    %vm1934 = vcmp.eq.s32.totalorder %v1922, %v1933
    %v1935 = vsel %vm1934, 1, 0
    %v1936 = vcvt.s32.f32 %v1935
    %v1937 = vld [vmem:[%s5] sm:$0xff]
    %1938 = vset.pattern.permute.xlu0 0
    %1939 = vperm.xlu0 %1938, %v1937
    %v1940 = vpop.permute.xlu0 %1939
    %vm1941 = vcmp.eq.s32.totalorder %v1922, %v1940
    %v1942 = vsel %vm1941, 1, 0
    %v1943 = vcvt.s32.f32 %v1942
    %vm1944 = vcmask 64512
    %v1946 = vsel %vm1944, %v1929, 0
    %1948 = vmatprep.subr.mxu0 0.0
    %1949 = vmatpush1.msra.mxu0 %v1918
    %1950 = vmatprep.subr.mxu0 0.0
    %1951 = vmatpush1.msra.mxu0 0.0
    %1952 = vmatprep.subr.mxu0 0.0
    %1953 = vmatpush1.msra.mxu0 0.0
    %1954 = vmatprep.subr.mxu0 0.0
    %1955 = vmatpush1.msra.mxu0 0.0
    %1956 = vmatprep.subr.mxu0 0.0
    %1957 = vmatpush1.msra.mxu0 0.0
    %1958 = vmatprep.subr.mxu0 0.0
    %1959 = vmatpush1.msra.mxu0 0.0
    %1960 = vmatprep.subr.mxu0 0.0
    %1961 = vmatpush1.msra.mxu0 0.0
    %1962 = vmatprep.subr.mxu0 0.0
    %1963 = vmatpush1.msra.mxu0 0.0
    %1964 = vmatprep.subr.mxu0 0.0
    %1965 = vmatpush1.msra.mxu0 0.0
    %1966 = vmatprep.subr.mxu0 0.0
    %1967 = vmatpush1.msra.mxu0 0.0
    %1968 = vmatprep.subr.mxu0 0.0
    %1969 = vmatpush1.msra.mxu0 0.0
    %1970 = vmatprep.subr.mxu0 0.0
    %1971 = vmatpush1.msra.mxu0 0.0
    %1972 = vmatprep.subr.mxu0 0.0
    %1973 = vmatpush1.msra.mxu0 0.0
    %1974 = vmatprep.subr.mxu0 0.0
    %1975 = vmatpush1.msra.mxu0 0.0
    %1976 = vmatprep.subr.mxu0 0.0
    %1977 = vmatpush1.msra.mxu0 0.0
    %1978 = vmatprep.subr.mxu0 0.0
    %1979 = vmatpush1.msra.mxu0 0.0
    %1980 = vmatprep.subr.mxu0 0.0
    %1981 = vmatpush1.msra.mxu0 0.0
    %1982 = vmatprep.subr.mxu0 0.0
    %1983 = vmatpush1.msra.mxu0 0.0
    %1984 = vmatprep.subr.mxu0 0.0
    %1985 = vmatpush1.msra.mxu0 0.0
    %1986 = vmatprep.subr.mxu0 0.0
    %1987 = vmatpush1.msra.mxu0 0.0
    %1988 = vmatprep.subr.mxu0 0.0
    %1989 = vmatpush1.msra.mxu0 0.0
    %1990 = vmatprep.subr.mxu0 0.0
    %1991 = vmatpush1.msra.mxu0 0.0
    %1992 = vmatprep.subr.mxu0 0.0
    %1993 = vmatpush1.msra.mxu0 0.0
    %1994 = vmatprep.subr.mxu0 0.0
    %1995 = vmatpush1.msra.mxu0 0.0
    %1996 = vmatprep.subr.mxu0 0.0
    %1997 = vmatpush1.msra.mxu0 0.0
    %1998 = vmatprep.subr.mxu0 0.0
    %1999 = vmatpush1.msra.mxu0 0.0
    %2000 = vmatprep.subr.mxu0 0.0
    %2001 = vmatpush1.msra.mxu0 0.0
    %2002 = vmatprep.subr.mxu0 0.0
    %2003 = vmatpush1.msra.mxu0 0.0
    %2004 = vmatprep.subr.mxu0 0.0
    %2005 = vmatpush1.msra.mxu0 0.0
    %2006 = vmatprep.subr.mxu0 0.0
    %2007 = vmatpush1.msra.mxu0 0.0
    %2008 = vmatprep.subr.mxu0 0.0
    %2009 = vmatpush1.msra.mxu0 0.0
    %2010 = vmatprep.subr.mxu0 0.0
    %2011 = vmatpush1.msra.mxu0 0.0
    %2012 = vmatprep.mubr.f32.mxu0 0.0
    %2013 = vmatmul.mubr.f32.gmra.mrb[0].mxu0 %v1946
    %v2014 = vpop.f32.mrb[0].mxu0
    %v2015 = vadd.f32 0.0, %v2014
    %v2016 = vpop.f32.mrb[0].mxu0
    %2017 = vdwg.mxu0
    %v2018 = vmul.f32 %v2015, %v1936
    %vm2019 = vcmask 48128
    %v2020 = vsel %vm2019, %v2018, 0.0
    %2021 = vadd.xlane.f32.xlu0 %v2020
    %v2022 = vpop.xlane.xlu0 %2021
    %v2023 = vmul.f32 %v2015, %v1943
    %v2024 = vsel %vm2019, %v2023, 0.0
    %2025 = vadd.xlane.f32.xlu0 %v2024
    %v2026 = vpop.xlane.xlu0 %2025
    %v2027 = vmul.f32 %v2022, 1.442695
    %v2028 = vpow.pop %v2027
    %v2029 = vmul.f32 %v2026, 1.442695
    %v2030 = vpow.pop %v2029
    %v2031 = vmul.f32 %v2030, 2.0
    %v2032 = vmul.f32 %v2028, 2.0
    %v2033 = vadd.f32 %v2032, %v2031
    %v2034 = vrcp.pop %v2033
    %v2035 = vmul.f32 %v2032, %v2034
    %v2036 = vlog2.pop %v2035
    %v2037 = vmul.f32 %v2036, 0.6931472
    %v2038 = vsub.f32 0.0, %v2037
    %v2039 = vadd.f32 %v2022, 1.0
    %v2040 = vmul.f32 %v2039, 0.5
    %v2041 = vsub.f32 %v2040, 1.0
    %v2042 = vand.u32 2147483647, %v2041
    %v2043 = vadd.f32 %v2026, 1.0
    %v2044 = vadd.f32 %v2042, %v2043
    %v2045 = vadd.f32 %v2038, %v2044
    %vm2046 = vcmask 7168
    %v2047 = vsel %vm2046, %v2045, 0.0
    %2048 = vadd.xlane.f32.xlu0 %v2047
    %v2049 = vpop.xlane.xlu0 %2048
    %v2050 = vrot.slane %v2049, 4
    %v2051 = vadd.f32 %v2049, %v2050
    %v2052 = vrot.slane %v2051, 2
    %v2053 = vadd.f32 %v2051, %v2052
    %v2054 = vrot.slane %v2053, 1
    %v2055 = vadd.f32 %v2053, %v2054
    %s2056 = vtos %v2055
    %v2057 = vrcp.pop 8.0
    %s2058 = vtos %v2057
    %s2059 = smul.f32 %s2056, %s2058
    %s2060 = scalar_lea.smem [#allocation26], 0
    %2061 = sst [smem:[%s2060]] %s2059
    // Predicated region
    $region166: #{tpu_custom_call.1} parent=1 // pred_check
      _
    $region167: #{tpu_custom_call.1} parent=1 // pred_check_branch
      %2063 = sbr.rel (0) target = $region169
    $region168: #{tpu_custom_call.1} parent=1 // pred_region
      %s2065 = ssub.s32 16, 16
      %2066 = vsyncadd [#allocation5], %s2065
      %2069 = dma.smem_to_hbm [#allocation26], 16, %s55, [#allocation5]
    $region169: #{tpu_custom_call.1} parent=1 // pred_fallthru
      _
    // Predicated region
    $region170: #{tpu_custom_call.1} parent=1 // pred_check
      _
    $region171: #{tpu_custom_call.1} parent=1 // pred_check_branch
      %2071 = sbr.rel (0) target = $region173
    $region172: #{tpu_custom_call.1} parent=1 // pred_region
      %s2073 = ssub.s32 128, 128
      %2074 = vsyncadd [#allocation4], %s2073
      %s2076 = sshll.u32 [#allocation27], 4
      %s2077 = int_to_ptr.vmem [resolvable:$true] %s2076
      %2079 = dma.vmem_to_hbm [thread:$0]  %s2077, 128, %s57, [#allocation4]
    $region173: #{tpu_custom_call.1} parent=1 // pred_fallthru
      _
    // Predicated region
    $region174: #{tpu_custom_call.1} parent=1 // pred_check
      _
    $region175: #{tpu_custom_call.1} parent=1 // pred_check_branch
      %2081 = sbr.rel (0) target = $region177
    $region176: #{tpu_custom_call.1} parent=1 // pred_region
      %s2083 = ssub.s32 128, 128
      %2084 = vsyncadd [#allocation29], %s2083
      %s2086 = sshll.u32 [#allocation28], 4
      %s2087 = int_to_ptr.vmem [resolvable:$true] %s2086
      %2089 = dma.vmem_to_hbm [thread:$0]  %s2087, 128, %s59, [#allocation29]
    $region177: #{tpu_custom_call.1} parent=1 // pred_fallthru
      _
    // Predicated region
    $region178: #{tpu_custom_call.1} parent=1 // pred_check
      _
    $region179: #{tpu_custom_call.1} parent=1 // pred_check_branch
      %2091 = sbr.rel (0) target = $region181
    $region180: #{tpu_custom_call.1} parent=1 // pred_region
      %2092 = dma.done [#allocation5], 16
    $region181: #{tpu_custom_call.1} parent=1 // pred_fallthru
      _
    // Predicated region
    $region182: #{tpu_custom_call.1} parent=1 // pred_check
      _
    $region183: #{tpu_custom_call.1} parent=1 // pred_check_branch
      %2094 = sbr.rel (0) target = $region185
    $region184: #{tpu_custom_call.1} parent=1 // pred_region
      %2095 = dma.done [#allocation4], 128
    $region185: #{tpu_custom_call.1} parent=1 // pred_fallthru
      _
    // Predicated region
    $region186: #{tpu_custom_call.1} parent=1 // pred_check
      _
    $region187: #{tpu_custom_call.1} parent=1 // pred_check_branch
      %2097 = sbr.rel (0) target = $region189
    $region188: #{tpu_custom_call.1} parent=1 // pred_region
      %2098 = dma.done [#allocation29], 128
    $region189: #{tpu_custom_call.1} parent=1 // pred_fallthru
      _
    %2099 = sfence
    %2100 = vsyncpa [#allocation3], 1
    %2101 = vsyncpa [#allocation7], 1
    %2102 = vsyncpa [#allocation10], 1
    %2103 = vsyncpa [#allocation13], 1
    %2104 = vsyncpa [#allocation16], 1
    %2105 = vsyncpa [#allocation19], 1
    %2106 = vsyncpa [#allocation22], 1
    %2107 = vsyncpa [#allocation25], 1
    %2108 = vsyncpa [#allocation4], 1
    %2109 = vsyncpa [#allocation29], 1
    %2110 = vsyncpa [#allocation5], 1

</llo_original>
